<compile_context>
chip_gen: v5e
topology: v5e:2x2
jax: 0.10.0
libtpu: 0.0.40
codegen_flags: <defaults>
</compile_context>

<pallas_src>
import functools

import jax
import jax.numpy as jnp
import numpy as np
from jax.experimental import pallas as pl
from jax.experimental.pallas import tpu as pltpu


# ----------------------------------------------------------------------------
# Pallas kernel: one grid step == one batch element, fully fused:
#   MHA(q <- kv)  ->  LN(residual)  ->  FFN  ->  LN(residual)
# ----------------------------------------------------------------------------
def cross_attn_block_kernel(
    x_ref, kv_ref, bias_ref,
    wq_ref, wkv_ref, wo_ref, w1_ref, w2_ref, vecs_ref, b1_ref,
    out_ref, *, num_heads):
  Lq, E = x_ref.shape            # batch dim is squeezed by the BlockSpec
  Lk = kv_ref.shape[0]           # padded key length (multiple of 8)
  H = num_heads
  hd = E // H

  x = x_ref[...].astype(jnp.float32)          # f32 residual stream
  vecs = vecs_ref[...]                        # (9, E) packed f32 vectors
  bq, bk, bv, bo = vecs[0:1], vecs[1:2], vecs[2:3], vecs[3:4]
  g1, be1 = vecs[4:5], vecs[5:6]
  b2 = vecs[6:7]
  g2, be2 = vecs[7:8], vecs[8:9]

  # --- fused in-projections: bf16 operands, f32 accumulation (MXU) ---
  q = jnp.dot(x_ref[...], wq_ref[...],
              preferred_element_type=jnp.float32) + bq       # 1/sqrt(hd) folded
  kvp = jnp.dot(kv_ref[...], wkv_ref[...],
                preferred_element_type=jnp.float32)           # (Lk, 2E)
  k = kvp[:, :E] + bk
  v = kvp[:, E:] + bv

  # --- head-major relayout: one transpose per tensor per step (no per-batch
  # loop / slices / concat any more).
  # TODO(synk): a fully transpose-free head split needs non-leading-batch-dim
  # dot_general lowering in Mosaic; leading-batch einsums below are the safe form.
  qh = q.reshape(Lq, H, hd).transpose(1, 0, 2).astype(jnp.bfloat16)   # (H,Lq,hd)
  kh = k.reshape(Lk, H, hd).transpose(1, 0, 2).astype(jnp.bfloat16)   # (H,Lk,hd)
  vh = v.reshape(Lk, H, hd).transpose(1, 0, 2).astype(jnp.bfloat16)   # (H,Lk,hd)

  s = jnp.einsum('hqd,hkd->hqk', qh, kh,
                 preferred_element_type=jnp.float32)                  # (H,Lq,Lk)
  s = s + bias_ref[...].reshape(1, 1, Lk)                             # key-pad bias
  # NOTE: a fully-masked key row attends uniformly here; PyTorch MHA emits NaN.
  m = jnp.max(s, axis=-1, keepdims=True)
  p = jnp.exp(s - m)
  p = p * pl.reciprocal(jnp.sum(p, axis=-1, keepdims=True), approx=True)
  ctx = jnp.einsum('hqk,hkd->hqd', p.astype(jnp.bfloat16), vh,
                   preferred_element_type=jnp.float32)                # (H,Lq,hd)
  ctx = ctx.transpose(1, 0, 2).reshape(Lq, E)

  attn = jnp.dot(ctx.astype(jnp.bfloat16), wo_ref[...],
                 preferred_element_type=jnp.float32) + bo             # (Lq, E)

  def layer_norm(z, g, b):
    mu = jnp.mean(z, axis=-1, keepdims=True)
    zc = z - mu
    var = jnp.mean(zc * zc, axis=-1, keepdims=True)   # two-pass variance (safe)
    return zc * jax.lax.rsqrt(var + 1e-5) * g + b

  # --- residual + LN, FFN (ReLU, bf16 hidden), residual + LN ---
  # TODO(synk): nn.Dropout is identity here (eval-mode inference).
  y = layer_norm(x + attn, g1, be1)
  h = jnp.maximum(
      jnp.dot(y.astype(jnp.bfloat16), w1_ref[...],
              preferred_element_type=jnp.float32) + b1_ref[...],
      0.0).astype(jnp.bfloat16)                                       # (Lq, 3E)
  f = jnp.dot(h, w2_ref[...], preferred_element_type=jnp.float32) + b2
  out = layer_norm(y + f, g2, be2)

  out_ref[...] = out.astype(out_ref.dtype)


def _zero_index(i, *, ndim):
  # constant index_map for grid-invariant weight blocks
  return (0,) * ndim


# ----------------------------------------------------------------------------
# Host-side packing: fold softmax scale into wq/bq, fuse wk|wv, cast weights to
# bf16, pack the small (1, E) vectors into one (9, E) f32 array.
# ----------------------------------------------------------------------------
def pack_direction_params(raw, num_heads):
  (wq, bq, wk, bk, wv, bv, wo, bo, g1, be1, w1, b1, w2, b2, g2, be2) = raw
  E = wq.shape[0]
  scale = 1.0 / ((E // num_heads) ** 0.5)
  wq_s = (wq * scale).astype(jnp.bfloat16)
  wkv = jnp.concatenate([wk, wv], axis=1).astype(jnp.bfloat16)        # (E, 2E)
  vecs = jnp.concatenate(
      [bq * scale, bk, bv, bo, g1, be1, b2, g2, be2], axis=0).astype(jnp.float32)
  return (wq_s, wkv, wo.astype(jnp.bfloat16), w1.astype(jnp.bfloat16),
          w2.astype(jnp.bfloat16), vecs, b1.astype(jnp.float32))


# ----------------------------------------------------------------------------
# Wrapper: one pallas_call per attention direction, grid over batch elements.
# ----------------------------------------------------------------------------
def cross_attn_block(q_emb, kv_emb, key_pad_mask_kv, packed, num_heads):
  B, Lq, E = q_emb.shape
  Lk = kv_emb.shape[1]

  # pad kv only to sublane granularity (multiple of 8); pad columns are
  # disabled by the additive -1e9 mask (no 128-padding of the projection M dim).
  Lk_pad = ((Lk + 7) // 8) * 8
  q_p = q_emb.astype(jnp.bfloat16)
  kv_p = jnp.pad(kv_emb, ((0, 0), (0, Lk_pad - Lk), (0, 0))).astype(jnp.bfloat16)
  mask_p = jnp.pad(key_pad_mask_kv, ((0, 0), (0, Lk_pad - Lk)),
                   constant_values=True)
  bias = jnp.where(mask_p, -1e9, 0.0).astype(jnp.float32).reshape(B, 1, Lk_pad)

  wq, wkv, wo, w1, w2, vecs, b1 = packed
  param_arrays = (wq, wkv, wo, w1, w2, vecs, b1)

  # one batch element per grid step (batch dim squeezed out of the kernel refs):
  # >= 2 grid steps -> DMA/compute overlap and v7x megacore sharding.
  seq_specs = [
      pl.BlockSpec((None, Lq, E), lambda i: (i, 0, 0)),       # query-side (bf16)
      pl.BlockSpec((None, Lk_pad, E), lambda i: (i, 0, 0)),   # kv-side (bf16)
      pl.BlockSpec((None, 1, Lk_pad), lambda i: (i, 0, 0)),   # additive mask bias
  ]
  # grid-invariant weights: full-array blocks, single pipeline buffer (their
  # index_map is constant, so a second buffer would be pure VMEM waste).
  param_specs = [
      pl.BlockSpec(p.shape, functools.partial(_zero_index, ndim=p.ndim),
                   pipeline_mode=pl.Buffered(1))
      for p in param_arrays
  ]

  kernel = functools.partial(cross_attn_block_kernel, num_heads=num_heads)
  return pl.pallas_call(
      kernel,
      out_shape=jax.ShapeDtypeStruct((B, Lq, E), jnp.float32),
      grid_spec=pltpu.PrefetchScalarGridSpec(
          num_scalar_prefetch=0,
          grid=(B,),
          in_specs=seq_specs + param_specs,
          out_specs=pl.BlockSpec((None, Lq, E), lambda i: (i, 0, 0)),
      ),
      compiler_params=pltpu.CompilerParams(
          dimension_semantics=("parallel",),
          vmem_limit_bytes=32 * 1024 * 1024),
  )(q_p, kv_p, bias, *param_arrays)


# ----------------------------------------------------------------------------
# Deterministic parameter init (one direction: MHA + FFN + 2 LayerNorms), f32.
# ----------------------------------------------------------------------------
def init_direction_params(key, embed_dim):
  E = embed_dim
  H3 = 3 * E
  ks = jax.random.split(key, 6)
  std = 0.02
  wq = jax.random.normal(ks[0], (E, E), jnp.float32) * std
  wk = jax.random.normal(ks[1], (E, E), jnp.float32) * std
  wv = jax.random.normal(ks[2], (E, E), jnp.float32) * std
  wo = jax.random.normal(ks[3], (E, E), jnp.float32) * std
  w1 = jax.random.normal(ks[4], (E, H3), jnp.float32) * std
  w2 = jax.random.normal(ks[5], (H3, E), jnp.float32) * std
  zeros_e = jnp.zeros((1, E), jnp.float32)
  ones_e = jnp.ones((1, E), jnp.float32)
  zeros_h = jnp.zeros((1, H3), jnp.float32)
  # (wq,bq,wk,bk,wv,bv,wo,bo, ln1_g,ln1_b, w1,b1,w2,b2, ln2_g,ln2_b)
  return (wq, zeros_e, wk, zeros_e, wv, zeros_e, wo, zeros_e,
          ones_e, zeros_e,
          w1, zeros_h, w2, zeros_e,
          ones_e, zeros_e)


# ----------------------------------------------------------------------------
# Pure-JAX f32 reference (mirrors PyTorch forward in eval mode)
# ----------------------------------------------------------------------------
def reference_block(q_emb, kv_emb, key_pad_mask_kv, P, num_heads):
  B, Lq, E = q_emb.shape
  Lk = kv_emb.shape[1]
  hd = E // num_heads
  (wq, bq, wk, bk, wv, bv, wo, bo, g1, be1, w1, bf1, w2, bf2, g2, be2) = P
  q = q_emb @ wq + bq.reshape(E)
  k = kv_emb @ wk + bk.reshape(E)
  v = kv_emb @ wv + bv.reshape(E)
  q = q.reshape(B, Lq, num_heads, hd).transpose(0, 2, 1, 3)
  k = k.reshape(B, Lk, num_heads, hd).transpose(0, 2, 1, 3)
  v = v.reshape(B, Lk, num_heads, hd).transpose(0, 2, 1, 3)
  s = jnp.einsum('bhqd,bhkd->bhqk', q, k) / jnp.sqrt(jnp.float32(hd))
  s = s + jnp.where(key_pad_mask_kv, -1e9, 0.0)[:, None, None, :]
  p = jax.nn.softmax(s, axis=-1)
  ctx = jnp.einsum('bhqk,bhkd->bhqd', p, v).transpose(0, 2, 1, 3).reshape(B, Lq, E)
  attn = ctx @ wo + bo.reshape(E)

  def ln(z, g, b):
    mu = z.mean(-1, keepdims=True)
    var = ((z - mu) ** 2).mean(-1, keepdims=True)
    return (z - mu) / jnp.sqrt(var + 1e-5) * g.reshape(E) + b.reshape(E)

  y = ln(q_emb + attn, g1, be1)
  h = jax.nn.relu(y @ w1 + bf1.reshape(-1))
  f = h @ w2 + bf2.reshape(E)
  return ln(y + f, g2, be2)


if __name__ == "__main__":
  # small shapes consistent with the module semantics
  B, L1, L2 = 2, 8, 16          # batch, modality1 seq, modality2 seq
  E, H = 128, 4                 # embed_dim, num_heads (head_dim = 32)

  root = jax.random.PRNGKey(0)
  k_m1, k_m2, k_p1, k_p2 = jax.random.split(root, 4)

  modality1 = jax.random.normal(k_m1, (B, L1, E), jnp.float32)
  modality2 = jax.random.normal(k_m2, (B, L2, E), jnp.float32)

  # key padding masks: True = padded position (ignored by attention)
  key_pad_mask_m1 = jnp.arange(L1)[None, :] >= jnp.array([L1, L1 - 2])[:, None]
  key_pad_mask_m2 = jnp.arange(L2)[None, :] >= jnp.array([L2 - 3, L2])[:, None]

  raw_12 = init_direction_params(k_p1, E)   # modality1 attends to modality2
  raw_21 = init_direction_params(k_p2, E)   # modality2 attends to modality1
  packed_12 = pack_direction_params(raw_12, H)
  packed_21 = pack_direction_params(raw_21, H)

  # forward pass (two fused Pallas calls, one per direction)
  x_m1 = cross_attn_block(modality1, modality2, key_pad_mask_m2, packed_12, H)
  x_m2 = cross_attn_block(modality2, modality1, key_pad_mask_m1, packed_21, H)
  jax.block_until_ready((x_m1, x_m2))

  # correctness vs pure-JAX f32 reference on the same bf16-quantized sequence
  # inputs (kernel feeds the sequences as bf16; matmul operands are bf16).
  m1_q = modality1.astype(jnp.bfloat16).astype(jnp.float32)
  m2_q = modality2.astype(jnp.bfloat16).astype(jnp.float32)
  ref_m1 = reference_block(m1_q, m2_q, key_pad_mask_m2, raw_12, H)
  ref_m2 = reference_block(m2_q, m1_q, key_pad_mask_m1, raw_21, H)
  np.testing.assert_allclose(np.asarray(x_m1), np.asarray(ref_m1),
                             rtol=2e-2, atol=2e-2)
  np.testing.assert_allclose(np.asarray(x_m2), np.asarray(ref_m2),
                             rtol=2e-2, atol=2e-2)

  print("KERNEL_OK")
</pallas_src>

<mosaic_0001>
module attributes {stable_mosaic.version = 11 : i64} {
  func.func @cross_attn_block_kernel(%arg0: i32, %arg1: memref<1x8x128xbf16, #tpu.memory_space<vmem>>, %arg2: memref<1x16x128xbf16, #tpu.memory_space<vmem>>, %arg3: memref<1x1x16xf32, #tpu.memory_space<vmem>>, %arg4: memref<128x128xbf16, #tpu.memory_space<vmem>>, %arg5: memref<128x256xbf16, #tpu.memory_space<vmem>>, %arg6: memref<128x128xbf16, #tpu.memory_space<vmem>>, %arg7: memref<128x384xbf16, #tpu.memory_space<vmem>>, %arg8: memref<384x128xbf16, #tpu.memory_space<vmem>>, %arg9: memref<9x128xf32, #tpu.memory_space<vmem>>, %arg10: memref<1x384xf32, #tpu.memory_space<vmem>>, %arg11: memref<1x8x128xf32, #tpu.memory_space<vmem>>) attributes {dimension_semantics = [#tpu.dimension_semantics<parallel>], iteration_bounds = array<i64: 2>, scalar_prefetch = 0 : i64, scratch_operands = 0 : i64, tpu.core_type = #tpu.core_type<tc>, window_params = [{transform_indices = @transform_0, window_bounds = array<i64: 1, 8, 128>}, {transform_indices = @transform_1, window_bounds = array<i64: 1, 16, 128>}, {transform_indices = @transform_2, window_bounds = array<i64: 1, 1, 16>}, {pipeline_mode = #tpu.pipeline_mode<synchronous>, transform_indices = @transform_3, window_bounds = array<i64: 128, 128>}, {pipeline_mode = #tpu.pipeline_mode<synchronous>, transform_indices = @transform_4, window_bounds = array<i64: 128, 256>}, {pipeline_mode = #tpu.pipeline_mode<synchronous>, transform_indices = @transform_5, window_bounds = array<i64: 128, 128>}, {pipeline_mode = #tpu.pipeline_mode<synchronous>, transform_indices = @transform_6, window_bounds = array<i64: 128, 384>}, {pipeline_mode = #tpu.pipeline_mode<synchronous>, transform_indices = @transform_7, window_bounds = array<i64: 384, 128>}, {pipeline_mode = #tpu.pipeline_mode<synchronous>, transform_indices = @transform_8, window_bounds = array<i64: 9, 128>}, {pipeline_mode = #tpu.pipeline_mode<synchronous>, transform_indices = @transform_9, window_bounds = array<i64: 1, 384>}, {transform_indices = @transform_10, window_bounds = array<i64: 1, 8, 128>}]} {
    %c0 = arith.constant 0 : index
    %c0_0 = arith.constant 0 : index
    %c0_1 = arith.constant 0 : index
    %0 = vector.load %arg1[%c0, %c0_0, %c0_1] : memref<1x8x128xbf16, #tpu.memory_space<vmem>>, vector<1x8x128xbf16>
    %1 = vector.shape_cast %0 : vector<1x8x128xbf16> to vector<8x128xbf16>
    %2 = arith.extf %1 : vector<8x128xbf16> to vector<8x128xf32>
    %c0_2 = arith.constant 0 : index
    %c0_3 = arith.constant 0 : index
    %3 = vector.load %arg9[%c0_2, %c0_3] : memref<9x128xf32, #tpu.memory_space<vmem>>, vector<9x128xf32>
    %4 = vector.extract_strided_slice %3 {offsets = [0, 0], sizes = [1, 128], strides = [1, 1]} : vector<9x128xf32> to vector<1x128xf32>
    %5 = vector.extract_strided_slice %3 {offsets = [1, 0], sizes = [1, 128], strides = [1, 1]} : vector<9x128xf32> to vector<1x128xf32>
    %6 = vector.extract_strided_slice %3 {offsets = [2, 0], sizes = [1, 128], strides = [1, 1]} : vector<9x128xf32> to vector<1x128xf32>
    %7 = vector.extract_strided_slice %3 {offsets = [3, 0], sizes = [1, 128], strides = [1, 1]} : vector<9x128xf32> to vector<1x128xf32>
    %8 = vector.extract_strided_slice %3 {offsets = [4, 0], sizes = [1, 128], strides = [1, 1]} : vector<9x128xf32> to vector<1x128xf32>
    %9 = vector.extract_strided_slice %3 {offsets = [5, 0], sizes = [1, 128], strides = [1, 1]} : vector<9x128xf32> to vector<1x128xf32>
    %10 = vector.extract_strided_slice %3 {offsets = [6, 0], sizes = [1, 128], strides = [1, 1]} : vector<9x128xf32> to vector<1x128xf32>
    %11 = vector.extract_strided_slice %3 {offsets = [7, 0], sizes = [1, 128], strides = [1, 1]} : vector<9x128xf32> to vector<1x128xf32>
    %12 = vector.extract_strided_slice %3 {offsets = [8, 0], sizes = [1, 128], strides = [1, 1]} : vector<9x128xf32> to vector<1x128xf32>
    %c0_4 = arith.constant 0 : index
    %c0_5 = arith.constant 0 : index
    %c0_6 = arith.constant 0 : index
    %13 = vector.load %arg1[%c0_4, %c0_5, %c0_6] : memref<1x8x128xbf16, #tpu.memory_space<vmem>>, vector<1x8x128xbf16>
    %14 = vector.shape_cast %13 : vector<1x8x128xbf16> to vector<8x128xbf16>
    %c0_7 = arith.constant 0 : index
    %c0_8 = arith.constant 0 : index
    %15 = vector.load %arg4[%c0_7, %c0_8] : memref<128x128xbf16, #tpu.memory_space<vmem>>, vector<128x128xbf16>
    %cst = arith.constant dense<0.000000e+00> : vector<8x128xf32>
    %16 = tpu.matmul %14, %15, %cst {dimension_numbers = #tpu.dot_dimension_numbers<[1], [0], [0], [1], [0, 0, 1, 1], [], []>} : vector<8x128xbf16>, vector<128x128xbf16>, vector<8x128xf32> -> vector<8x128xf32>
    %17 = vector.broadcast %4 : vector<1x128xf32> to vector<8x128xf32>
    %18 = arith.addf %16, %17 : vector<8x128xf32>
    %c0_9 = arith.constant 0 : index
    %c0_10 = arith.constant 0 : index
    %c0_11 = arith.constant 0 : index
    %19 = vector.load %arg2[%c0_9, %c0_10, %c0_11] : memref<1x16x128xbf16, #tpu.memory_space<vmem>>, vector<1x16x128xbf16>
    %20 = vector.shape_cast %19 : vector<1x16x128xbf16> to vector<16x128xbf16>
    %c0_12 = arith.constant 0 : index
    %c0_13 = arith.constant 0 : index
    %21 = vector.load %arg5[%c0_12, %c0_13] : memref<128x256xbf16, #tpu.memory_space<vmem>>, vector<128x256xbf16>
    %cst_14 = arith.constant dense<0.000000e+00> : vector<16x256xf32>
    %22 = tpu.matmul %20, %21, %cst_14 {dimension_numbers = #tpu.dot_dimension_numbers<[1], [0], [0], [1], [0, 0, 1, 1], [], []>} : vector<16x128xbf16>, vector<128x256xbf16>, vector<16x256xf32> -> vector<16x256xf32>
    %23 = vector.extract_strided_slice %22 {offsets = [0, 0], sizes = [16, 128], strides = [1, 1]} : vector<16x256xf32> to vector<16x128xf32>
    %24 = vector.broadcast %5 : vector<1x128xf32> to vector<16x128xf32>
    %25 = arith.addf %23, %24 : vector<16x128xf32>
    %26 = vector.extract_strided_slice %22 {offsets = [0, 128], sizes = [16, 128], strides = [1, 1]} : vector<16x256xf32> to vector<16x128xf32>
    %27 = vector.broadcast %6 : vector<1x128xf32> to vector<16x128xf32>
    %28 = arith.addf %26, %27 : vector<16x128xf32>
    %29 = vector.shape_cast %18 : vector<8x128xf32> to vector<8x4x32xf32>
    %30 = tpu.transpose %29, [1, 0, 2] : vector<8x4x32xf32> -> vector<4x8x32xf32>
    %31 = arith.truncf %30 : vector<4x8x32xf32> to vector<4x8x32xbf16>
    %32 = vector.shape_cast %25 : vector<16x128xf32> to vector<16x4x32xf32>
    %33 = tpu.transpose %32, [1, 0, 2] : vector<16x4x32xf32> -> vector<4x16x32xf32>
    %34 = arith.truncf %33 : vector<4x16x32xf32> to vector<4x16x32xbf16>
    %35 = vector.shape_cast %28 : vector<16x128xf32> to vector<16x4x32xf32>
    %36 = tpu.transpose %35, [1, 0, 2] : vector<16x4x32xf32> -> vector<4x16x32xf32>
    %37 = arith.truncf %36 : vector<4x16x32xf32> to vector<4x16x32xbf16>
    "tpu.trace_start"() <{level = 10 : i32, message = "hqd,hkd->hqk"}> : () -> ()
    %cst_15 = arith.constant dense<0.000000e+00> : vector<4x8x16xf32>
    %38 = tpu.matmul %31, %34, %cst_15 {dimension_numbers = #tpu.dot_dimension_numbers<[2], [2], [1], [1], [0, 0, 0, 1, 1, 1], [0], [0]>} : vector<4x8x32xbf16>, vector<4x16x32xbf16>, vector<4x8x16xf32> -> vector<4x8x16xf32>
    "tpu.trace_stop"() : () -> ()
    %c0_16 = arith.constant 0 : index
    %c0_17 = arith.constant 0 : index
    %c0_18 = arith.constant 0 : index
    %39 = vector.load %arg3[%c0_16, %c0_17, %c0_18] : memref<1x1x16xf32, #tpu.memory_space<vmem>>, vector<1x1x16xf32>
    %40 = vector.shape_cast %39 : vector<1x1x16xf32> to vector<1x16xf32>
    %41 = vector.shape_cast %40 : vector<1x16xf32> to vector<1x1x16xf32>
    %42 = vector.broadcast %41 : vector<1x1x16xf32> to vector<4x8x16xf32>
    %43 = arith.addf %38, %42 : vector<4x8x16xf32>
    %cst_19 = arith.constant dense<0xFF800000> : vector<4x8xf32>
    %44 = vector.multi_reduction <maximumf>, %43, %cst_19 [2] : vector<4x8x16xf32> to vector<4x8xf32>
    %45 = vector.shape_cast %44 : vector<4x8xf32> to vector<4x8x1xf32>
    %46 = vector.broadcast %45 : vector<4x8x1xf32> to vector<4x8x16xf32>
    %47 = arith.subf %43, %46 : vector<4x8x16xf32>
    %48 = math.exp %47 : vector<4x8x16xf32>
    %cst_20 = arith.constant dense<0.000000e+00> : vector<4x8xf32>
    %49 = vector.multi_reduction <add>, %48, %cst_20 [2] : vector<4x8x16xf32> to vector<4x8xf32>
    %50 = vector.shape_cast %49 : vector<4x8xf32> to vector<4x8x1xf32>
    %51 = tpu.reciprocal %50 {approx = true} : vector<4x8x1xf32> -> vector<4x8x1xf32>
    %52 = vector.broadcast %51 : vector<4x8x1xf32> to vector<4x8x16xf32>
    %53 = arith.mulf %48, %52 : vector<4x8x16xf32>
    %54 = arith.truncf %53 : vector<4x8x16xf32> to vector<4x8x16xbf16>
    "tpu.trace_start"() <{level = 10 : i32, message = "hqk,hkd->hqd"}> : () -> ()
    %cst_21 = arith.constant dense<0.000000e+00> : vector<4x8x32xf32>
    %55 = tpu.matmul %54, %37, %cst_21 {dimension_numbers = #tpu.dot_dimension_numbers<[2], [1], [1], [2], [0, 0, 0, 1, 1, 2], [0], [0]>} : vector<4x8x16xbf16>, vector<4x16x32xbf16>, vector<4x8x32xf32> -> vector<4x8x32xf32>
    "tpu.trace_stop"() : () -> ()
    %56 = tpu.transpose %55, [1, 0, 2] : vector<4x8x32xf32> -> vector<8x4x32xf32>
    %57 = vector.shape_cast %56 : vector<8x4x32xf32> to vector<8x128xf32>
    %58 = arith.truncf %57 : vector<8x128xf32> to vector<8x128xbf16>
    %c0_22 = arith.constant 0 : index
    %c0_23 = arith.constant 0 : index
    %59 = vector.load %arg6[%c0_22, %c0_23] : memref<128x128xbf16, #tpu.memory_space<vmem>>, vector<128x128xbf16>
    %cst_24 = arith.constant dense<0.000000e+00> : vector<8x128xf32>
    %60 = tpu.matmul %58, %59, %cst_24 {dimension_numbers = #tpu.dot_dimension_numbers<[1], [0], [0], [1], [0, 0, 1, 1], [], []>} : vector<8x128xbf16>, vector<128x128xbf16>, vector<8x128xf32> -> vector<8x128xf32>
    %61 = vector.broadcast %7 : vector<1x128xf32> to vector<8x128xf32>
    %62 = arith.addf %60, %61 : vector<8x128xf32>
    %63 = arith.addf %2, %62 : vector<8x128xf32>
    %cst_25 = arith.constant dense<0.000000e+00> : vector<8xf32>
    %64 = vector.multi_reduction <add>, %63, %cst_25 [1] : vector<8x128xf32> to vector<8xf32>
    %65 = vector.shape_cast %64 : vector<8xf32> to vector<8x1xf32>
    %cst_26 = arith.constant 1.280000e+02 : f32
    %66 = vector.broadcast %cst_26 : f32 to vector<8x1xf32>
    %67 = arith.divf %65, %66 : vector<8x1xf32>
    %68 = vector.broadcast %67 : vector<8x1xf32> to vector<8x128xf32>
    %69 = arith.subf %63, %68 : vector<8x128xf32>
    %70 = arith.mulf %69, %69 : vector<8x128xf32>
    %cst_27 = arith.constant dense<0.000000e+00> : vector<8xf32>
    %71 = vector.multi_reduction <add>, %70, %cst_27 [1] : vector<8x128xf32> to vector<8xf32>
    %72 = vector.shape_cast %71 : vector<8xf32> to vector<8x1xf32>
    %cst_28 = arith.constant 1.280000e+02 : f32
    %73 = vector.broadcast %cst_28 : f32 to vector<8x1xf32>
    %74 = arith.divf %72, %73 : vector<8x1xf32>
    %cst_29 = arith.constant 9.99999974E-6 : f32
    %75 = vector.broadcast %cst_29 : f32 to vector<8x1xf32>
    %76 = arith.addf %74, %75 : vector<8x1xf32>
    %77 = math.rsqrt %76 : vector<8x1xf32>
    %78 = vector.broadcast %77 : vector<8x1xf32> to vector<8x128xf32>
    %79 = arith.mulf %69, %78 : vector<8x128xf32>
    %80 = vector.broadcast %8 : vector<1x128xf32> to vector<8x128xf32>
    %81 = arith.mulf %79, %80 : vector<8x128xf32>
    %82 = vector.broadcast %9 : vector<1x128xf32> to vector<8x128xf32>
    %83 = arith.addf %81, %82 : vector<8x128xf32>
    %84 = arith.truncf %83 : vector<8x128xf32> to vector<8x128xbf16>
    %c0_30 = arith.constant 0 : index
    %c0_31 = arith.constant 0 : index
    %85 = vector.load %arg7[%c0_30, %c0_31] : memref<128x384xbf16, #tpu.memory_space<vmem>>, vector<128x384xbf16>
    %cst_32 = arith.constant dense<0.000000e+00> : vector<8x384xf32>
    %86 = tpu.matmul %84, %85, %cst_32 {dimension_numbers = #tpu.dot_dimension_numbers<[1], [0], [0], [1], [0, 0, 1, 1], [], []>} : vector<8x128xbf16>, vector<128x384xbf16>, vector<8x384xf32> -> vector<8x384xf32>
    %c0_33 = arith.constant 0 : index
    %c0_34 = arith.constant 0 : index
    %87 = vector.load %arg10[%c0_33, %c0_34] : memref<1x384xf32, #tpu.memory_space<vmem>>, vector<1x384xf32>
    %88 = vector.broadcast %87 : vector<1x384xf32> to vector<8x384xf32>
    %89 = arith.addf %86, %88 : vector<8x384xf32>
    %cst_35 = arith.constant 0.000000e+00 : f32
    %90 = vector.broadcast %cst_35 : f32 to vector<8x384xf32>
    %91 = arith.maximumf %89, %90 : vector<8x384xf32>
    %92 = arith.truncf %91 : vector<8x384xf32> to vector<8x384xbf16>
    %c0_36 = arith.constant 0 : index
    %c0_37 = arith.constant 0 : index
    %93 = vector.load %arg8[%c0_36, %c0_37] : memref<384x128xbf16, #tpu.memory_space<vmem>>, vector<384x128xbf16>
    %cst_38 = arith.constant dense<0.000000e+00> : vector<8x128xf32>
    %94 = tpu.matmul %92, %93, %cst_38 {dimension_numbers = #tpu.dot_dimension_numbers<[1], [0], [0], [1], [0, 0, 1, 1], [], []>} : vector<8x384xbf16>, vector<384x128xbf16>, vector<8x128xf32> -> vector<8x128xf32>
    %95 = vector.broadcast %10 : vector<1x128xf32> to vector<8x128xf32>
    %96 = arith.addf %94, %95 : vector<8x128xf32>
    %97 = arith.addf %83, %96 : vector<8x128xf32>
    %cst_39 = arith.constant dense<0.000000e+00> : vector<8xf32>
    %98 = vector.multi_reduction <add>, %97, %cst_39 [1] : vector<8x128xf32> to vector<8xf32>
    %99 = vector.shape_cast %98 : vector<8xf32> to vector<8x1xf32>
    %cst_40 = arith.constant 1.280000e+02 : f32
    %100 = vector.broadcast %cst_40 : f32 to vector<8x1xf32>
    %101 = arith.divf %99, %100 : vector<8x1xf32>
    %102 = vector.broadcast %101 : vector<8x1xf32> to vector<8x128xf32>
    %103 = arith.subf %97, %102 : vector<8x128xf32>
    %104 = arith.mulf %103, %103 : vector<8x128xf32>
    %cst_41 = arith.constant dense<0.000000e+00> : vector<8xf32>
    %105 = vector.multi_reduction <add>, %104, %cst_41 [1] : vector<8x128xf32> to vector<8xf32>
    %106 = vector.shape_cast %105 : vector<8xf32> to vector<8x1xf32>
    %cst_42 = arith.constant 1.280000e+02 : f32
    %107 = vector.broadcast %cst_42 : f32 to vector<8x1xf32>
    %108 = arith.divf %106, %107 : vector<8x1xf32>
    %cst_43 = arith.constant 9.99999974E-6 : f32
    %109 = vector.broadcast %cst_43 : f32 to vector<8x1xf32>
    %110 = arith.addf %108, %109 : vector<8x1xf32>
    %111 = math.rsqrt %110 : vector<8x1xf32>
    %112 = vector.broadcast %111 : vector<8x1xf32> to vector<8x128xf32>
    %113 = arith.mulf %103, %112 : vector<8x128xf32>
    %114 = vector.broadcast %11 : vector<1x128xf32> to vector<8x128xf32>
    %115 = arith.mulf %113, %114 : vector<8x128xf32>
    %116 = vector.broadcast %12 : vector<1x128xf32> to vector<8x128xf32>
    %117 = arith.addf %115, %116 : vector<8x128xf32>
    %c0_44 = arith.constant 0 : index
    %c0_45 = arith.constant 0 : index
    %c0_46 = arith.constant 0 : index
    %118 = vector.load %arg11[%c0_44, %c0_45, %c0_46] : memref<1x8x128xf32, #tpu.memory_space<vmem>>, vector<1x8x128xf32>
    %119 = vector.shape_cast %118 : vector<1x8x128xf32> to vector<8x128xf32>
    %120 = vector.shape_cast %117 : vector<8x128xf32> to vector<1x8x128xf32>
    tpu.vector_store %arg11[%c0_44, %c0_45, %c0_46], %120 {strides = array<i32>} : memref<1x8x128xf32, #tpu.memory_space<vmem>>, vector<1x8x128xf32>,
    return
  }
  func.func @transform_0(%arg0: i32) -> (i32, i32, i32) {
    %c0_i32 = arith.constant 0 : i32
    %c0_i32_0 = arith.constant 0 : i32
    %c0_i32_1 = arith.constant 0 : i32
    return %arg0, %c0_i32, %c0_i32_0 : i32, i32, i32
  }
  func.func @transform_1(%arg0: i32) -> (i32, i32, i32) {
    %c0_i32 = arith.constant 0 : i32
    %c0_i32_0 = arith.constant 0 : i32
    %c0_i32_1 = arith.constant 0 : i32
    return %arg0, %c0_i32, %c0_i32_0 : i32, i32, i32
  }
  func.func @transform_2(%arg0: i32) -> (i32, i32, i32) {
    %c0_i32 = arith.constant 0 : i32
    %c0_i32_0 = arith.constant 0 : i32
    %c0_i32_1 = arith.constant 0 : i32
    return %arg0, %c0_i32, %c0_i32_0 : i32, i32, i32
  }
  func.func @transform_3(%arg0: i32) -> (i32, i32) {
    %c0_i32 = arith.constant 0 : i32
    %c0_i32_0 = arith.constant 0 : i32
    %c0_i32_1 = arith.constant 0 : i32
    return %c0_i32, %c0_i32_0 : i32, i32
  }
  func.func @transform_4(%arg0: i32) -> (i32, i32) {
    %c0_i32 = arith.constant 0 : i32
    %c0_i32_0 = arith.constant 0 : i32
    %c0_i32_1 = arith.constant 0 : i32
    return %c0_i32, %c0_i32_0 : i32, i32
  }
  func.func @transform_5(%arg0: i32) -> (i32, i32) {
    %c0_i32 = arith.constant 0 : i32
    %c0_i32_0 = arith.constant 0 : i32
    %c0_i32_1 = arith.constant 0 : i32
    return %c0_i32, %c0_i32_0 : i32, i32
  }
  func.func @transform_6(%arg0: i32) -> (i32, i32) {
    %c0_i32 = arith.constant 0 : i32
    %c0_i32_0 = arith.constant 0 : i32
    %c0_i32_1 = arith.constant 0 : i32
    return %c0_i32, %c0_i32_0 : i32, i32
  }
  func.func @transform_7(%arg0: i32) -> (i32, i32) {
    %c0_i32 = arith.constant 0 : i32
    %c0_i32_0 = arith.constant 0 : i32
    %c0_i32_1 = arith.constant 0 : i32
    return %c0_i32, %c0_i32_0 : i32, i32
  }
  func.func @transform_8(%arg0: i32) -> (i32, i32) {
    %c0_i32 = arith.constant 0 : i32
    %c0_i32_0 = arith.constant 0 : i32
    %c0_i32_1 = arith.constant 0 : i32
    return %c0_i32, %c0_i32_0 : i32, i32
  }
  func.func @transform_9(%arg0: i32) -> (i32, i32) {
    %c0_i32 = arith.constant 0 : i32
    %c0_i32_0 = arith.constant 0 : i32
    %c0_i32_1 = arith.constant 0 : i32
    return %c0_i32, %c0_i32_0 : i32, i32
  }
  func.func @transform_10(%arg0: i32) -> (i32, i32, i32) {
    %c0_i32 = arith.constant 0 : i32
    %c0_i32_0 = arith.constant 0 : i32
    %c0_i32_1 = arith.constant 0 : i32
    return %arg0, %c0_i32, %c0_i32_0 : i32, i32, i32
  }
}

</mosaic_0001>

<llo_original>
// kernel: tpu_custom_call.1
$region0: #{tpu_custom_call.1}
  #allocation0 [shape = 'u32[]', space=smem, size = 0x4, offset = 0x4, fixed_abs, tag = 'smem constant byte address 0x4 - core index']
  #allocation1 [shape = 'u32[72,128]{1,0:T(1,128)}', space=vmem, size = 0x9000, scoped, tag = 'internal scratch']
  %s0 = inlined_call_operand.hbm [shape: bf16[2,8,128], index: 0, kind: input, shape index: {}]
  %s1 = inlined_call_operand.hbm [shape: bf16[2,16,128], index: 1, kind: input, shape index: {}]
  %s2 = inlined_call_operand.hbm [shape: f32[2,1,16], index: 2, kind: input, shape index: {}]
  %s3 = inlined_call_operand.hbm [shape: bf16[128,128], index: 3, kind: input, shape index: {}]
  %s4 = inlined_call_operand.hbm [shape: bf16[128,256], index: 4, kind: input, shape index: {}]
  %s5 = inlined_call_operand.hbm [shape: bf16[128,128], index: 5, kind: input, shape index: {}]
  %s6 = inlined_call_operand.hbm [shape: bf16[128,384], index: 6, kind: input, shape index: {}]
  %s7 = inlined_call_operand.hbm [shape: bf16[384,128], index: 7, kind: input, shape index: {}]
  %s8 = inlined_call_operand.hbm [shape: f32[9,128], index: 8, kind: input, shape index: {}]
  %s9 = inlined_call_operand.vmem [shape: f32[1,384], index: 9, kind: input, shape index: {}]
  %s10 = inlined_call_operand.hbm [shape: f32[2,8,128], index: 10, kind: output, shape index: {}]
  %s11 = sld [smem:[#allocation0]]
  $region109: #{tpu_custom_call.1} parent=0
    _
  %s13 = ssub.s32 1, %s11
  %s14 = scalar_select 0, %s13, %s11
  $region1: #{tpu_custom_call.1} parent=0
    #allocation2 [shape = 'u8[4096]{0}', space=vmem, size = 0x1000, scoped, tag = 'input window, operand 0']
    #allocation3 [shape = 's32[2]{0}', space=sflag, size = 0x8, scoped, tag = 'scoped memory for tpu_custom_call.1']
    #allocation4 [shape = 's32[2]{0}', space=sflag, size = 0x8, scoped, tag = 'scoped memory for tpu_custom_call.1']
    #allocation5 [shape = 'u8[8192]{0}', space=vmem, size = 0x2000, scoped, tag = 'input window, operand 1']
    #allocation6 [shape = 's32[2]{0}', space=sflag, size = 0x8, scoped, tag = 'scoped memory for tpu_custom_call.1']
    #allocation7 [shape = 'u8[1024]{0}', space=vmem, size = 0x400, scoped, tag = 'input window, operand 2']
    #allocation8 [shape = 'u8[32768]{0}', space=vmem, size = 0x8000, scoped, tag = 'input window, operand 3, single buffered']
    #allocation9 [shape = 's32[1]{0}', space=sflag, size = 0x4, scoped, tag = 'scoped memory for tpu_custom_call.1']
    #allocation10 [shape = 'u8[65536]{0}', space=vmem, size = 0x10000, scoped, tag = 'input window, operand 4, single buffered']
    #allocation11 [shape = 'u8[32768]{0}', space=vmem, size = 0x8000, scoped, tag = 'input window, operand 5, single buffered']
    #allocation12 [shape = 's32[1]{0}', space=sflag, size = 0x4, scoped, tag = 'scoped memory for tpu_custom_call.1']
    #allocation13 [shape = 'u8[98304]{0}', space=vmem, size = 0x18000, scoped, tag = 'input window, operand 6, single buffered']
    #allocation14 [shape = 'u8[98304]{0}', space=vmem, size = 0x18000, scoped, tag = 'input window, operand 7, single buffered']
    #allocation15 [shape = 's32[1]{0}', space=sflag, size = 0x4, scoped, tag = 'scoped memory for tpu_custom_call.1']
    #allocation16 [shape = 'u8[8192]{0}', space=vmem, size = 0x2000, scoped, tag = 'input window, operand 8, single buffered']
    #allocation17 [shape = 'u8[8192]{0}', space=vmem, size = 0x2000, scoped, tag = 'output window, operand 0']
    %15 = vsyncpa [#allocation3], 0
    %s16 = scalar_lea.sflag [#allocation3], 1
    %17 = vsyncpa %s16, 0
    %18 = vsyncpa [#allocation6], 0
    %s19 = scalar_lea.sflag [#allocation6], 1
    %20 = vsyncpa %s19, 0
    %21 = vsyncpa [#allocation9], 0
    %22 = vsyncpa [#allocation12], 0
    %23 = vsyncpa [#allocation15], 0
    %24 = vsyncpa [#allocation4], 0
    %s25 = scalar_lea.sflag [#allocation4], 1
    %26 = vsyncpa %s25, 0
    loop: start=0, step=1, limit=4
    $region2: #{tpu_custom_call.1} parent=1 // loop_pre_header
      _
    $region3: #{tpu_custom_call.1} parent=1 // loop_header
      %s28 = sphi 0, %s32
      %p29 = scmp.ge.s32.totalorder %s28, 4
      %s38 = sphi 0, %s40
      %s41 = sphi 0, %s38
      %s42 = sphi 0, %s41
      %s58 = sphi 0, %s42
      %s64 = sphi 0, %s66
      %s67 = sphi 0, %s64
      %s68 = sphi 0, %s67
      %s84 = sphi 0, %s68
      %s90 = sphi 0, %s92
      %s93 = sphi 0, %s90
      %s94 = sphi 0, %s93
      %s110 = sphi 0, %s94
      %s114 = sphi 0, %s114
      %s116 = sphi 0, %s114
      %s117 = sphi 0, %s116
      %s131 = sphi 0, %s117
      %s135 = sphi 0, %s135
      %s137 = sphi 0, %s135
      %s138 = sphi 0, %s137
      %s152 = sphi 0, %s138
      %s156 = sphi 0, %s156
      %s158 = sphi 0, %s156
      %s159 = sphi 0, %s158
      %s173 = sphi 0, %s159
      %s177 = sphi 0, %s177
      %s179 = sphi 0, %s177
      %s180 = sphi 0, %s179
      %s194 = sphi 0, %s180
      %s198 = sphi 0, %s198
      %s200 = sphi 0, %s198
      %s201 = sphi 0, %s200
      %s215 = sphi 0, %s201
      %s219 = sphi 0, %s219
      %s221 = sphi 0, %s219
      %s222 = sphi 0, %s221
      %s236 = sphi 0, %s222
      %s240 = sphi 0, %s240
      %s242 = sphi 0, %s240
      %s243 = sphi 0, %s242
      %s257 = sphi 0, %s243
      %s263 = sphi 0, %s265
      %s266 = sphi 0, %s263
      %s267 = sphi 0, %s266
      %s283 = sphi 0, %s267
    $region4: #{tpu_custom_call.1} parent=1 // loop_header_branch
      %31 = sbr.rel (%p29) target = $region8
    $region5: #{tpu_custom_call.1} parent=1 // loop_body
      %s33 = ssub.s32 %s28, 1
      %s34 = ssub.s32 %s28, 2
      %s35 = sadd.s32 %s28, 1
      %s36 = ssub.s32 %s28, %s35
      %p37 = scmp.eq.s32.totalorder %s36, 0
      %s39 = sadd.s32 %s38, 1
      %s40 = scalar_select %p37, %s38, %s39
      %p43 = pneg %p37
      %p44 = scmp.eq.s32.totalorder %s28, 1
      %p45 = por %p43, %p44
      %p46 = scmp.ne.s32.totalorder %s38, %s41
      %p47 = scmp.eq.s32.totalorder %s28, 0
      %p48 = por %p46, %p47
      %p49 = scmp.ne.s32.totalorder %s38, %s41
      %p50 = scmp.eq.s32.totalorder %s33, 1
      %p51 = por %p49, %p50
      %p52 = scmp.ne.s32.totalorder %s41, %s42
      %p53 = scmp.eq.s32.totalorder %s33, 0
      %p54 = por %p52, %p53
      %p55 = scmp.ne.s32.totalorder %s41, %s42
      %p56 = scmp.eq.s32.totalorder %s34, 1
      %p57 = por %p55, %p56
      %p59 = scmp.ne.s32.totalorder %s42, %s58
      %p60 = scmp.eq.s32.totalorder %s34, 0
      %p61 = por %p59, %p60
      %s62 = ssub.s32 %s28, %s35
      %p63 = scmp.eq.s32.totalorder %s62, 0
      %s65 = sadd.s32 %s64, 1
      %s66 = scalar_select %p63, %s64, %s65
      %p69 = pneg %p63
      %p70 = scmp.eq.s32.totalorder %s28, 1
      %p71 = por %p69, %p70
      %p72 = scmp.ne.s32.totalorder %s64, %s67
      %p73 = scmp.eq.s32.totalorder %s28, 0
      %p74 = por %p72, %p73
      %p75 = scmp.ne.s32.totalorder %s64, %s67
      %p76 = scmp.eq.s32.totalorder %s33, 1
      %p77 = por %p75, %p76
      %p78 = scmp.ne.s32.totalorder %s67, %s68
      %p79 = scmp.eq.s32.totalorder %s33, 0
      %p80 = por %p78, %p79
      %p81 = scmp.ne.s32.totalorder %s67, %s68
      %p82 = scmp.eq.s32.totalorder %s34, 1
      %p83 = por %p81, %p82
      %p85 = scmp.ne.s32.totalorder %s68, %s84
      %p86 = scmp.eq.s32.totalorder %s34, 0
      %p87 = por %p85, %p86
      %s88 = ssub.s32 %s28, %s35
      %p89 = scmp.eq.s32.totalorder %s88, 0
      %s91 = sadd.s32 %s90, 1
      %s92 = scalar_select %p89, %s90, %s91
      %p95 = pneg %p89
      %p96 = scmp.eq.s32.totalorder %s28, 1
      %p97 = por %p95, %p96
      %p98 = scmp.ne.s32.totalorder %s90, %s93
      %p99 = scmp.eq.s32.totalorder %s28, 0
      %p100 = por %p98, %p99
      %p101 = scmp.ne.s32.totalorder %s90, %s93
      %p102 = scmp.eq.s32.totalorder %s33, 1
      %p103 = por %p101, %p102
      %p104 = scmp.ne.s32.totalorder %s93, %s94
      %p105 = scmp.eq.s32.totalorder %s33, 0
      %p106 = por %p104, %p105
      %p107 = scmp.ne.s32.totalorder %s93, %s94
      %p108 = scmp.eq.s32.totalorder %s34, 1
      %p109 = por %p107, %p108
      %p111 = scmp.ne.s32.totalorder %s94, %s110
      %p112 = scmp.eq.s32.totalorder %s34, 0
      %p113 = por %p111, %p112
      %s115 = sadd.s32 %s114, 1
      %p118 = scmp.eq.s32.totalorder %s28, 1
      %p119 = scmp.ne.s32.totalorder %s114, %s116
      %p120 = scmp.eq.s32.totalorder %s28, 0
      %p121 = por %p119, %p120
      %p122 = scmp.ne.s32.totalorder %s114, %s116
      %p123 = scmp.eq.s32.totalorder %s33, 1
      %p124 = por %p122, %p123
      %p125 = scmp.ne.s32.totalorder %s116, %s117
      %p126 = scmp.eq.s32.totalorder %s33, 0
      %p127 = por %p125, %p126
      %p128 = scmp.ne.s32.totalorder %s116, %s117
      %p129 = scmp.eq.s32.totalorder %s34, 1
      %p130 = por %p128, %p129
      %p132 = scmp.ne.s32.totalorder %s117, %s131
      %p133 = scmp.eq.s32.totalorder %s34, 0
      %p134 = por %p132, %p133
      %s136 = sadd.s32 %s135, 1
      %p139 = scmp.eq.s32.totalorder %s28, 1
      %p140 = scmp.ne.s32.totalorder %s135, %s137
      %p141 = scmp.eq.s32.totalorder %s28, 0
      %p142 = por %p140, %p141
      %p143 = scmp.ne.s32.totalorder %s135, %s137
      %p144 = scmp.eq.s32.totalorder %s33, 1
      %p145 = por %p143, %p144
      %p146 = scmp.ne.s32.totalorder %s137, %s138
      %p147 = scmp.eq.s32.totalorder %s33, 0
      %p148 = por %p146, %p147
      %p149 = scmp.ne.s32.totalorder %s137, %s138
      %p150 = scmp.eq.s32.totalorder %s34, 1
      %p151 = por %p149, %p150
      %p153 = scmp.ne.s32.totalorder %s138, %s152
      %p154 = scmp.eq.s32.totalorder %s34, 0
      %p155 = por %p153, %p154
      %s157 = sadd.s32 %s156, 1
      %p160 = scmp.eq.s32.totalorder %s28, 1
      %p161 = scmp.ne.s32.totalorder %s156, %s158
      %p162 = scmp.eq.s32.totalorder %s28, 0
      %p163 = por %p161, %p162
      %p164 = scmp.ne.s32.totalorder %s156, %s158
      %p165 = scmp.eq.s32.totalorder %s33, 1
      %p166 = por %p164, %p165
      %p167 = scmp.ne.s32.totalorder %s158, %s159
      %p168 = scmp.eq.s32.totalorder %s33, 0
      %p169 = por %p167, %p168
      %p170 = scmp.ne.s32.totalorder %s158, %s159
      %p171 = scmp.eq.s32.totalorder %s34, 1
      %p172 = por %p170, %p171
      %p174 = scmp.ne.s32.totalorder %s159, %s173
      %p175 = scmp.eq.s32.totalorder %s34, 0
      %p176 = por %p174, %p175
      %s178 = sadd.s32 %s177, 1
      %p181 = scmp.eq.s32.totalorder %s28, 1
      %p182 = scmp.ne.s32.totalorder %s177, %s179
      %p183 = scmp.eq.s32.totalorder %s28, 0
      %p184 = por %p182, %p183
      %p185 = scmp.ne.s32.totalorder %s177, %s179
      %p186 = scmp.eq.s32.totalorder %s33, 1
      %p187 = por %p185, %p186
      %p188 = scmp.ne.s32.totalorder %s179, %s180
      %p189 = scmp.eq.s32.totalorder %s33, 0
      %p190 = por %p188, %p189
      %p191 = scmp.ne.s32.totalorder %s179, %s180
      %p192 = scmp.eq.s32.totalorder %s34, 1
      %p193 = por %p191, %p192
      %p195 = scmp.ne.s32.totalorder %s180, %s194
      %p196 = scmp.eq.s32.totalorder %s34, 0
      %p197 = por %p195, %p196
      %s199 = sadd.s32 %s198, 1
      %p202 = scmp.eq.s32.totalorder %s28, 1
      %p203 = scmp.ne.s32.totalorder %s198, %s200
      %p204 = scmp.eq.s32.totalorder %s28, 0
      %p205 = por %p203, %p204
      %p206 = scmp.ne.s32.totalorder %s198, %s200
      %p207 = scmp.eq.s32.totalorder %s33, 1
      %p208 = por %p206, %p207
      %p209 = scmp.ne.s32.totalorder %s200, %s201
      %p210 = scmp.eq.s32.totalorder %s33, 0
      %p211 = por %p209, %p210
      %p212 = scmp.ne.s32.totalorder %s200, %s201
      %p213 = scmp.eq.s32.totalorder %s34, 1
      %p214 = por %p212, %p213
      %p216 = scmp.ne.s32.totalorder %s201, %s215
      %p217 = scmp.eq.s32.totalorder %s34, 0
      %p218 = por %p216, %p217
      %s220 = sadd.s32 %s219, 1
      %p223 = scmp.eq.s32.totalorder %s28, 1
      %p224 = scmp.ne.s32.totalorder %s219, %s221
      %p225 = scmp.eq.s32.totalorder %s28, 0
      %p226 = por %p224, %p225
      %p227 = scmp.ne.s32.totalorder %s219, %s221
      %p228 = scmp.eq.s32.totalorder %s33, 1
      %p229 = por %p227, %p228
      %p230 = scmp.ne.s32.totalorder %s221, %s222
      %p231 = scmp.eq.s32.totalorder %s33, 0
      %p232 = por %p230, %p231
      %p233 = scmp.ne.s32.totalorder %s221, %s222
      %p234 = scmp.eq.s32.totalorder %s34, 1
      %p235 = por %p233, %p234
      %p237 = scmp.ne.s32.totalorder %s222, %s236
      %p238 = scmp.eq.s32.totalorder %s34, 0
      %p239 = por %p237, %p238
      %s241 = sadd.s32 %s240, 1
      %p244 = scmp.eq.s32.totalorder %s28, 1
      %p245 = scmp.ne.s32.totalorder %s240, %s242
      %p246 = scmp.eq.s32.totalorder %s28, 0
      %p247 = por %p245, %p246
      %p248 = scmp.ne.s32.totalorder %s240, %s242
      %p249 = scmp.eq.s32.totalorder %s33, 1
      %p250 = por %p248, %p249
      %p251 = scmp.ne.s32.totalorder %s242, %s243
      %p252 = scmp.eq.s32.totalorder %s33, 0
      %p253 = por %p251, %p252
      %p254 = scmp.ne.s32.totalorder %s242, %s243
      %p255 = scmp.eq.s32.totalorder %s34, 1
      %p256 = por %p254, %p255
      %p258 = scmp.ne.s32.totalorder %s243, %s257
      %p259 = scmp.eq.s32.totalorder %s34, 0
      %p260 = por %p258, %p259
      %s261 = ssub.s32 %s28, %s35
      %p262 = scmp.eq.s32.totalorder %s261, 0
      %s264 = sadd.s32 %s263, 1
      %s265 = scalar_select %p262, %s263, %s264
      %p268 = pneg %p262
      %p269 = scmp.eq.s32.totalorder %s28, 1
      %p270 = por %p268, %p269
      %p271 = scmp.ne.s32.totalorder %s263, %s266
      %p272 = scmp.eq.s32.totalorder %s28, 0
      %p273 = por %p271, %p272
      %p274 = scmp.ne.s32.totalorder %s263, %s266
      %p275 = scmp.eq.s32.totalorder %s33, 1
      %p276 = por %p274, %p275
      %p277 = scmp.ne.s32.totalorder %s266, %s267
      %p278 = scmp.eq.s32.totalorder %s33, 0
      %p279 = por %p277, %p278
      %p280 = scmp.ne.s32.totalorder %s266, %s267
      %p281 = scmp.eq.s32.totalorder %s34, 1
      %p282 = por %p280, %p281
      %p284 = scmp.ne.s32.totalorder %s267, %s283
      %p285 = scmp.eq.s32.totalorder %s34, 0
      %p286 = por %p284, %p285
      %p287 = scmp.le.s32.totalorder 1, %s28
      %p288 = scmp.lt.s32.totalorder %s28, 3
      %p289 = pnand %p287, %p288
      %p290 = pneg %p289
      // Predicated region
      $region9: #{tpu_custom_call.1} parent=5 // pred_check
        _
      $region10: #{tpu_custom_call.1} parent=5 // pred_check_branch
        %292 = sbr.rel (%p289) target = $region12
      $region11: #{tpu_custom_call.1} parent=5 // pred_region
        %s293 = ssub.s32 %s28, 1
        // Predicated region
        $region13: #{tpu_custom_call.1} parent=11 // pred_check
          %p294 = pneg %p127
        $region14: #{tpu_custom_call.1} parent=11 // pred_check_branch
          %296 = sbr.rel (%p294) target = $region16
        $region15: #{tpu_custom_call.1} parent=11 // pred_region
          %298 = vsyncadd [#allocation9], 0
          %s299 = sshll.u32 %s3, 4
          %s300 = int_to_ptr.hbm [resolvable:$true] %s299
          %s301 = sshll.u32 [#allocation8], 4
          %s302 = int_to_ptr.vmem [resolvable:$true] %s301
          %307 = dma.hbm_to_vmem [thread:$0]  %s300, 1024, %s302, [#allocation9], 64, 64, 4
        $region16: #{tpu_custom_call.1} parent=11 // pred_fallthru
          _
        // Predicated region
        $region17: #{tpu_custom_call.1} parent=11 // pred_check
          %p308 = pneg %p148
        $region18: #{tpu_custom_call.1} parent=11 // pred_check_branch
          %310 = sbr.rel (%p308) target = $region20
        $region19: #{tpu_custom_call.1} parent=11 // pred_region
          %312 = vsyncadd [#allocation9], 0
          %s313 = sshll.u32 %s4, 4
          %s314 = int_to_ptr.hbm [resolvable:$true] %s313
          %s315 = sshll.u32 [#allocation10], 4
          %s316 = int_to_ptr.vmem [resolvable:$true] %s315
          %321 = dma.hbm_to_vmem [thread:$0]  %s314, 2048, %s316, [#allocation9], 128, 128, 8
        $region20: #{tpu_custom_call.1} parent=11 // pred_fallthru
          _
        // Predicated region
        $region21: #{tpu_custom_call.1} parent=11 // pred_check
          %p322 = pneg %p169
        $region22: #{tpu_custom_call.1} parent=11 // pred_check_branch
          %324 = sbr.rel (%p322) target = $region24
        $region23: #{tpu_custom_call.1} parent=11 // pred_region
          %326 = vsyncadd [#allocation12], 0
          %s327 = sshll.u32 %s5, 4
          %s328 = int_to_ptr.hbm [resolvable:$true] %s327
          %s329 = sshll.u32 [#allocation11], 4
          %s330 = int_to_ptr.vmem [resolvable:$true] %s329
          %335 = dma.hbm_to_vmem [thread:$0]  %s328, 1024, %s330, [#allocation12], 64, 64, 4
        $region24: #{tpu_custom_call.1} parent=11 // pred_fallthru
          _
        // Predicated region
        $region25: #{tpu_custom_call.1} parent=11 // pred_check
          %p336 = pneg %p190
        $region26: #{tpu_custom_call.1} parent=11 // pred_check_branch
          %338 = sbr.rel (%p336) target = $region28
        $region27: #{tpu_custom_call.1} parent=11 // pred_region
          %340 = vsyncadd [#allocation12], 0
          %s341 = sshll.u32 %s6, 4
          %s342 = int_to_ptr.hbm [resolvable:$true] %s341
          %s343 = sshll.u32 [#allocation13], 4
          %s344 = int_to_ptr.vmem [resolvable:$true] %s343
          %349 = dma.hbm_to_vmem [thread:$0]  %s342, 3072, %s344, [#allocation12], 192, 192, 12
        $region28: #{tpu_custom_call.1} parent=11 // pred_fallthru
          _
        // Predicated region
        $region29: #{tpu_custom_call.1} parent=11 // pred_check
          %p350 = pneg %p211
        $region30: #{tpu_custom_call.1} parent=11 // pred_check_branch
          %352 = sbr.rel (%p350) target = $region32
        $region31: #{tpu_custom_call.1} parent=11 // pred_region
          %354 = vsyncadd [#allocation15], 0
          %s355 = sshll.u32 %s7, 4
          %s356 = int_to_ptr.hbm [resolvable:$true] %s355
          %s357 = sshll.u32 [#allocation14], 4
          %s358 = int_to_ptr.vmem [resolvable:$true] %s357
          %363 = dma.hbm_to_vmem [thread:$0]  %s356, 3072, %s358, [#allocation15], 64, 64, 4
        $region32: #{tpu_custom_call.1} parent=11 // pred_fallthru
          _
        // Predicated region
        $region33: #{tpu_custom_call.1} parent=11 // pred_check
          %p364 = pneg %p232
        $region34: #{tpu_custom_call.1} parent=11 // pred_check_branch
          %366 = sbr.rel (%p364) target = $region36
        $region35: #{tpu_custom_call.1} parent=11 // pred_region
          %368 = vsyncadd [#allocation15], 0
          %s369 = sshll.u32 %s8, 4
          %s370 = int_to_ptr.hbm [resolvable:$true] %s369
          %s371 = sshll.u32 [#allocation16], 4
          %s372 = int_to_ptr.vmem [resolvable:$true] %s371
          %377 = dma.hbm_to_vmem [thread:$0]  %s370, 256, %s372, [#allocation15], 128, 128, 8
        $region36: #{tpu_custom_call.1} parent=11 // pred_fallthru
          _
        // Predicated region
        $region37: #{tpu_custom_call.1} parent=11 // pred_check
          %p378 = pneg %p253
        $region38: #{tpu_custom_call.1} parent=11 // pred_check_branch
          %380 = sbr.rel (%p378) target = $region40
        $region39: #{tpu_custom_call.1} parent=11 // pred_region
          _
        $region40: #{tpu_custom_call.1} parent=11 // pred_fallthru
          _
      $region12: #{tpu_custom_call.1} parent=5 // pred_fallthru
        _
      %p381 = scmp.lt.s32.totalorder %s28, 2
      // Predicated region
      $region41: #{tpu_custom_call.1} parent=5 // pred_check
        %p382 = pneg %p381
      $region42: #{tpu_custom_call.1} parent=5 // pred_check_branch
        %384 = sbr.rel (%p382) target = $region44
      $region43: #{tpu_custom_call.1} parent=5 // pred_region
        // Predicated region
        $region45: #{tpu_custom_call.1} parent=43 // pred_check
          %p385 = pneg %p48
        $region46: #{tpu_custom_call.1} parent=43 // pred_check_branch
          %387 = sbr.rel (%p385) target = $region48
        $region47: #{tpu_custom_call.1} parent=43 // pred_region
          %s388 = sand.u32 %s38, 1
          %s389 = scalar_lea.sflag [#allocation3], %s388
          %s390 = sand.u32 %s38, 1
          %s391 = smul.addr %s390, 4
          %s392 = scalar_lea.vmem [#allocation2], %s391
          %394 = vsyncadd %s389, 0
          %s395 = smul.addr %s28, 4
          %s396 = scalar_lea.hbm %s0, %s395
          %s398 = sshll.u32 %s396, 4
          %s399 = int_to_ptr.hbm [resolvable:$true] %s398
          %s400 = sshll.u32 %s392, 4
          %s401 = int_to_ptr.vmem [resolvable:$true] %s400
          %403 = dma.hbm_to_vmem [thread:$0]  %s399, 64, %s401, %s389
        $region48: #{tpu_custom_call.1} parent=43 // pred_fallthru
          _
        // Predicated region
        $region49: #{tpu_custom_call.1} parent=43 // pred_check
          %p404 = pneg %p74
        $region50: #{tpu_custom_call.1} parent=43 // pred_check_branch
          %406 = sbr.rel (%p404) target = $region52
        $region51: #{tpu_custom_call.1} parent=43 // pred_region
          %s407 = sand.u32 %s28, 1
          %s408 = scalar_lea.sflag [#allocation6], %s407
          %s409 = sand.u32 %s64, 1
          %s410 = smul.addr %s409, 8
          %s411 = scalar_lea.vmem [#allocation5], %s410
          %413 = vsyncadd %s408, 0
          %s414 = smul.addr %s28, 2
          %s415 = smul.addr %s414, 4
          %s416 = scalar_lea.hbm %s1, %s415
          %s417 = sshll.u32 %s416, 4
          %s418 = int_to_ptr.hbm [resolvable:$true] %s417
          %s419 = sshll.u32 %s411, 4
          %s420 = int_to_ptr.vmem [resolvable:$true] %s419
          %425 = dma.hbm_to_vmem [thread:$0]  %s418, 128, %s420, %s408, 64, 64, 4
        $region52: #{tpu_custom_call.1} parent=43 // pred_fallthru
          _
        // Predicated region
        $region53: #{tpu_custom_call.1} parent=43 // pred_check
          %p426 = pneg %p100
        $region54: #{tpu_custom_call.1} parent=43 // pred_check_branch
          %428 = sbr.rel (%p426) target = $region56
        $region55: #{tpu_custom_call.1} parent=43 // pred_region
          %s429 = sand.u32 %s28, 1
          %s430 = scalar_lea.sflag [#allocation6], %s429
          %s431 = sand.u32 %s90, 1
          %s432 = scalar_lea.vmem [#allocation7], %s431
          %434 = vsyncadd %s430, 0
          %s435 = scalar_lea.hbm %s2, %s28
          %s437 = sshll.u32 %s435, 4
          %s438 = int_to_ptr.hbm [resolvable:$true] %s437
          %s439 = sshll.u32 %s432, 4
          %s440 = int_to_ptr.vmem [resolvable:$true] %s439
          %442 = dma.hbm_to_vmem [thread:$0]  %s438, 16, %s440, %s430
        $region56: #{tpu_custom_call.1} parent=43 // pred_fallthru
          _
      $region44: #{tpu_custom_call.1} parent=5 // pred_fallthru
        _
      %p443 = scmp.le.s32.totalorder 1, %s28
      %p444 = scmp.lt.s32.totalorder %s28, 3
      %p445 = pnand %p443, %p444
      %p446 = pneg %p445
      // Predicated region
      $region57: #{tpu_custom_call.1} parent=5 // pred_check
        _
      $region58: #{tpu_custom_call.1} parent=5 // pred_check_branch
        %448 = sbr.rel (%p445) target = $region60
      $region59: #{tpu_custom_call.1} parent=5 // pred_region
        %s449 = ssub.s32 %s28, 1
        %s450 = sand.u32 %s41, 1
        %s451 = scalar_lea.sflag [#allocation3], %s450
        %s452 = sand.u32 %s41, 1
        %s453 = smul.addr %s452, 4
        %s454 = scalar_lea.vmem [#allocation2], %s453
        // Predicated region
        $region61: #{tpu_custom_call.1} parent=59 // pred_check
          %p455 = pneg %p54
        $region62: #{tpu_custom_call.1} parent=59 // pred_check_branch
          %457 = sbr.rel (%p455) target = $region64
        $region63: #{tpu_custom_call.1} parent=59 // pred_region
          %459 = dma.done %s451, 64
        $region64: #{tpu_custom_call.1} parent=59 // pred_fallthru
          _
        %s460 = sand.u32 %s33, 1
        %s461 = scalar_lea.sflag [#allocation6], %s460
        %s462 = sand.u32 %s67, 1
        %s463 = smul.addr %s462, 8
        %s464 = scalar_lea.vmem [#allocation5], %s463
        // Predicated region
        $region65: #{tpu_custom_call.1} parent=59 // pred_check
          %p465 = pneg %p80
        $region66: #{tpu_custom_call.1} parent=59 // pred_check_branch
          %467 = sbr.rel (%p465) target = $region68
        $region67: #{tpu_custom_call.1} parent=59 // pred_region
          %469 = dma.done %s461, 128
        $region68: #{tpu_custom_call.1} parent=59 // pred_fallthru
          _
        %s470 = sand.u32 %s33, 1
        %s471 = scalar_lea.sflag [#allocation6], %s470
        %s472 = sand.u32 %s93, 1
        %s473 = scalar_lea.vmem [#allocation7], %s472
        // Predicated region
        $region69: #{tpu_custom_call.1} parent=59 // pred_check
          %p474 = pneg %p106
        $region70: #{tpu_custom_call.1} parent=59 // pred_check_branch
          %476 = sbr.rel (%p474) target = $region72
        $region71: #{tpu_custom_call.1} parent=59 // pred_region
          %478 = dma.done %s471, 16
        $region72: #{tpu_custom_call.1} parent=59 // pred_fallthru
          _
        // Predicated region
        $region73: #{tpu_custom_call.1} parent=59 // pred_check
          %p479 = pneg %p127
        $region74: #{tpu_custom_call.1} parent=59 // pred_check_branch
          %481 = sbr.rel (%p479) target = $region76
        $region75: #{tpu_custom_call.1} parent=59 // pred_region
          %483 = dma.done [#allocation9], 1024
        $region76: #{tpu_custom_call.1} parent=59 // pred_fallthru
          _
        // Predicated region
        $region77: #{tpu_custom_call.1} parent=59 // pred_check
          %p484 = pneg %p148
        $region78: #{tpu_custom_call.1} parent=59 // pred_check_branch
          %486 = sbr.rel (%p484) target = $region80
        $region79: #{tpu_custom_call.1} parent=59 // pred_region
          %488 = dma.done [#allocation9], 2048
        $region80: #{tpu_custom_call.1} parent=59 // pred_fallthru
          _
        // Predicated region
        $region81: #{tpu_custom_call.1} parent=59 // pred_check
          %p489 = pneg %p169
        $region82: #{tpu_custom_call.1} parent=59 // pred_check_branch
          %491 = sbr.rel (%p489) target = $region84
        $region83: #{tpu_custom_call.1} parent=59 // pred_region
          %493 = dma.done [#allocation12], 1024
        $region84: #{tpu_custom_call.1} parent=59 // pred_fallthru
          _
        // Predicated region
        $region85: #{tpu_custom_call.1} parent=59 // pred_check
          %p494 = pneg %p190
        $region86: #{tpu_custom_call.1} parent=59 // pred_check_branch
          %496 = sbr.rel (%p494) target = $region88
        $region87: #{tpu_custom_call.1} parent=59 // pred_region
          %498 = dma.done [#allocation12], 3072
        $region88: #{tpu_custom_call.1} parent=59 // pred_fallthru
          _
        // Predicated region
        $region89: #{tpu_custom_call.1} parent=59 // pred_check
          %p499 = pneg %p211
        $region90: #{tpu_custom_call.1} parent=59 // pred_check_branch
          %501 = sbr.rel (%p499) target = $region92
        $region91: #{tpu_custom_call.1} parent=59 // pred_region
          %503 = dma.done [#allocation15], 3072
        $region92: #{tpu_custom_call.1} parent=59 // pred_fallthru
          _
        // Predicated region
        $region93: #{tpu_custom_call.1} parent=59 // pred_check
          %p504 = pneg %p232
        $region94: #{tpu_custom_call.1} parent=59 // pred_check_branch
          %506 = sbr.rel (%p504) target = $region96
        $region95: #{tpu_custom_call.1} parent=59 // pred_region
          %508 = dma.done [#allocation15], 256
        $region96: #{tpu_custom_call.1} parent=59 // pred_fallthru
          _
        %s509 = sand.u32 %s41, 1
        %s510 = scalar_lea.sflag [#allocation3], %s509
        %s511 = sand.u32 %s41, 1
        %s512 = smul.addr %s511, 4
        %s513 = scalar_lea.vmem [#allocation2], %s512
        %p514 = pneg %p54
        %p515 = pneg %p51
        %s516 = sand.u32 %s33, 1
        %s517 = scalar_lea.sflag [#allocation6], %s516
        %s518 = sand.u32 %s67, 1
        %s519 = smul.addr %s518, 8
        %s520 = scalar_lea.vmem [#allocation5], %s519
        %p521 = pneg %p80
        %p522 = pneg %p77
        %s523 = sand.u32 %s33, 1
        %s524 = scalar_lea.sflag [#allocation6], %s523
        %s525 = sand.u32 %s93, 1
        %s526 = scalar_lea.vmem [#allocation7], %s525
        %p527 = pneg %p106
        %p528 = pneg %p103
        %p529 = pneg %p127
        %p530 = pneg %p124
        %p531 = pneg %p148
        %p532 = pneg %p145
        %p533 = pneg %p169
        %p534 = pneg %p166
        %p535 = pneg %p190
        %p536 = pneg %p187
        %p537 = pneg %p211
        %p538 = pneg %p208
        %p539 = pneg %p232
        %p540 = pneg %p229
        %p541 = pneg %p253
        %p542 = pneg %p250
        %p543 = pneg %p279
        %p544 = pneg %p276
        %s545 = sand.u32 %s266, 1
        %s546 = scalar_lea.sflag [#allocation4], %s545
        %s547 = sand.u32 %s266, 1
        %s548 = smul.addr %s547, 8
        %s549 = scalar_lea.vmem [#allocation17], %s548
        %v551 = vld [vmem:[%s454] sm:$0xf]
        %v552 = vunpack.c.l.bf16 %v551
        %v553 = vld [vmem:[#allocation16] sm:$0xff]
        %v554 = vld [vmem:[#allocation16 + $0x8] sm:$0x1]
        %v555 = vld [vmem:[#allocation8] sm:$0xf]
        %v556 = vld [vmem:[#allocation8 + $0x4] sm:$0xf]
        %v557 = vld [vmem:[#allocation8 + $0x8] sm:$0xf]
        %v558 = vld [vmem:[#allocation8 + $0xc] sm:$0xf]
        %v559 = vld [vmem:[#allocation8 + $0x10] sm:$0xf]
        %v560 = vld [vmem:[#allocation8 + $0x14] sm:$0xf]
        %v561 = vld [vmem:[#allocation8 + $0x18] sm:$0xf]
        %v562 = vld [vmem:[#allocation8 + $0x1c] sm:$0xf]
        %v563 = vld [vmem:[#allocation8 + $0x20] sm:$0xf]
        %v564 = vld [vmem:[#allocation8 + $0x24] sm:$0xf]
        %v565 = vld [vmem:[#allocation8 + $0x28] sm:$0xf]
        %v566 = vld [vmem:[#allocation8 + $0x2c] sm:$0xf]
        %v567 = vld [vmem:[#allocation8 + $0x30] sm:$0xf]
        %v568 = vld [vmem:[#allocation8 + $0x34] sm:$0xf]
        %v569 = vld [vmem:[#allocation8 + $0x38] sm:$0xf]
        %v570 = vld [vmem:[#allocation8 + $0x3c] sm:$0xf]
        %v571 = vperm.slane %v553, 0
        %v588 = vunpack.c.l.b16 %v555
        %v589 = vunpack.c.l.b16 %v556
        %v590 = vunpack.c.l.b16 %v557
        %v591 = vunpack.c.l.b16 %v558
        %v592 = vunpack.c.l.b16 %v559
        %v593 = vunpack.c.l.b16 %v560
        %v594 = vunpack.c.l.b16 %v561
        %v595 = vunpack.c.l.b16 %v562
        %v596 = vunpack.c.l.b16 %v563
        %v597 = vunpack.c.l.b16 %v564
        %v598 = vunpack.c.l.b16 %v565
        %v599 = vunpack.c.l.b16 %v566
        %v600 = vunpack.c.l.b16 %v567
        %v601 = vunpack.c.l.b16 %v568
        %v602 = vunpack.c.l.b16 %v569
        %v603 = vunpack.c.l.b16 %v570
        %v604 = vpack.c.b16 %v589, %v588
        %v605 = vpack.c.b16 %v591, %v590
        %v606 = vpack.c.b16 %v593, %v592
        %v607 = vpack.c.b16 %v595, %v594
        %v608 = vpack.c.b16 %v597, %v596
        %v609 = vpack.c.b16 %v599, %v598
        %v610 = vpack.c.b16 %v601, %v600
        %v611 = vpack.c.b16 %v603, %v602
        %620 = vmatpush.bf16.msra.mxu0 %v611
        %621 = vmatpush.bf16.msra.mxu0 %v610
        %622 = vmatpush.bf16.msra.mxu0 %v609
        %623 = vmatpush.bf16.msra.mxu0 %v608
        %624 = vmatpush.bf16.msra.mxu0 %v607
        %625 = vmatpush.bf16.msra.mxu0 %v606
        %626 = vmatpush.bf16.msra.mxu0 %v605
        %627 = vmatpush.bf16.msra.mxu0 %v604
        %628 = vmatmul.bf16.gmra.mxu0 %v551
        %v629 = vpop.f32.mrf.mxu0
        %v630 = vadd.f32 %v571, %v629
        %v631 = vpop.f32.mrf.mxu0
        %632 = vdwg.mxu0
        %v633 = vld [vmem:[%s464] sm:$0xf]
        %v634 = vld [vmem:[%s464 + $0x4] sm:$0xf]
        %v635 = vld [vmem:[#allocation10] sm:$0xff]
        %v636 = vld [vmem:[#allocation10 + $0x8] sm:$0xff]
        %v637 = vld [vmem:[#allocation10 + $0x10] sm:$0xff]
        %v638 = vld [vmem:[#allocation10 + $0x18] sm:$0xff]
        %v639 = vld [vmem:[#allocation10 + $0x20] sm:$0xff]
        %v640 = vld [vmem:[#allocation10 + $0x28] sm:$0xff]
        %v641 = vld [vmem:[#allocation10 + $0x30] sm:$0xff]
        %v642 = vld [vmem:[#allocation10 + $0x38] sm:$0xff]
        %v643 = vld [vmem:[#allocation10 + $0x40] sm:$0xff]
        %v644 = vld [vmem:[#allocation10 + $0x48] sm:$0xff]
        %v645 = vld [vmem:[#allocation10 + $0x50] sm:$0xff]
        %v646 = vld [vmem:[#allocation10 + $0x58] sm:$0xff]
        %v647 = vld [vmem:[#allocation10 + $0x60] sm:$0xff]
        %v648 = vld [vmem:[#allocation10 + $0x68] sm:$0xff]
        %v649 = vld [vmem:[#allocation10 + $0x70] sm:$0xff]
        %v650 = vld [vmem:[#allocation10 + $0x78] sm:$0xff]
        %v653 = vunpack.c.l.b16 %v633
        %v654 = vunpack.c.l.b16 %v634
        %v655 = vpack.c.b16 %v654, %v653
        %v673 = vunpack.c.l.b16 %v635
        %v674 = vunpack.c.h.b16 %v635
        %v675 = vunpack.c.l.b16 %v636
        %v676 = vunpack.c.h.b16 %v636
        %v677 = vunpack.c.l.b16 %v637
        %v678 = vunpack.c.h.b16 %v637
        %v679 = vunpack.c.l.b16 %v638
        %v680 = vunpack.c.h.b16 %v638
        %v681 = vunpack.c.l.b16 %v639
        %v682 = vunpack.c.h.b16 %v639
        %v683 = vunpack.c.l.b16 %v640
        %v684 = vunpack.c.h.b16 %v640
        %v685 = vunpack.c.l.b16 %v641
        %v686 = vunpack.c.h.b16 %v641
        %v687 = vunpack.c.l.b16 %v642
        %v688 = vunpack.c.h.b16 %v642
        %v689 = vunpack.c.l.b16 %v643
        %v690 = vunpack.c.h.b16 %v643
        %v691 = vunpack.c.l.b16 %v644
        %v692 = vunpack.c.h.b16 %v644
        %v693 = vunpack.c.l.b16 %v645
        %v694 = vunpack.c.h.b16 %v645
        %v695 = vunpack.c.l.b16 %v646
        %v696 = vunpack.c.h.b16 %v646
        %v697 = vunpack.c.l.b16 %v647
        %v698 = vunpack.c.h.b16 %v647
        %v699 = vunpack.c.l.b16 %v648
        %v700 = vunpack.c.h.b16 %v648
        %v701 = vunpack.c.l.b16 %v649
        %v702 = vunpack.c.h.b16 %v649
        %v703 = vunpack.c.l.b16 %v650
        %v704 = vunpack.c.h.b16 %v650
        %v705 = vpack.c.b16 %v675, %v673
        %v706 = vpack.c.b16 %v676, %v674
        %v707 = vpack.c.b16 %v679, %v677
        %v708 = vpack.c.b16 %v680, %v678
        %v709 = vpack.c.b16 %v683, %v681
        %v710 = vpack.c.b16 %v684, %v682
        %v711 = vpack.c.b16 %v687, %v685
        %v712 = vpack.c.b16 %v688, %v686
        %v713 = vpack.c.b16 %v691, %v689
        %v714 = vpack.c.b16 %v692, %v690
        %v715 = vpack.c.b16 %v695, %v693
        %v716 = vpack.c.b16 %v696, %v694
        %v717 = vpack.c.b16 %v699, %v697
        %v718 = vpack.c.b16 %v700, %v698
        %v719 = vpack.c.b16 %v703, %v701
        %v720 = vpack.c.b16 %v704, %v702
        %737 = vmatpush.bf16.msra.mxu0 %v719
        %738 = vmatpush.bf16.msra.mxu0 %v717
        %739 = vmatpush.bf16.msra.mxu0 %v715
        %740 = vmatpush.bf16.msra.mxu0 %v713
        %741 = vmatpush.bf16.msra.mxu0 %v711
        %742 = vmatpush.bf16.msra.mxu0 %v709
        %743 = vmatpush.bf16.msra.mxu0 %v707
        %744 = vmatpush.bf16.msra.mxu0 %v705
        %745 = vmatmul.bf16.gmra.mxu0 %v655
        %v746 = vpop.f32.mrf.mxu0
        %v747 = vadd.f32 0.0, %v746
        %v748 = vpop.f32.mrf.mxu0
        %v749 = vadd.f32 0.0, %v748
        %750 = vdwg.mxu0
        %751 = vmatpush.bf16.msra.mxu0 %v720
        %752 = vmatpush.bf16.msra.mxu0 %v718
        %753 = vmatpush.bf16.msra.mxu0 %v716
        %754 = vmatpush.bf16.msra.mxu0 %v714
        %755 = vmatpush.bf16.msra.mxu0 %v712
        %756 = vmatpush.bf16.msra.mxu0 %v710
        %757 = vmatpush.bf16.msra.mxu0 %v708
        %758 = vmatpush.bf16.msra.mxu0 %v706
        %759 = vmatmul.bf16.gmra.mxu0 %v655
        %v760 = vpop.f32.mrf.mxu0
        %v761 = vadd.f32 0.0, %v760
        %v762 = vpop.f32.mrf.mxu0
        %v763 = vadd.f32 0.0, %v762
        %764 = vdwg.mxu0
        %v765 = vperm.slane %v553, 1
        %v766 = vadd.f32 %v747, %v765
        %v767 = vadd.f32 %v749, %v765
        %v768 = vperm.slane %v553, 2
        %v769 = vadd.f32 %v761, %v768
        %v770 = vadd.f32 %v763, %v768
        %772 = vrot.lane.b32.xlu0 %v630, 96
        %v773 = vpop.permute.xlu0 %772
        %775 = vrot.lane.b32.xlu0 %v630, 64
        %v776 = vpop.permute.xlu0 %775
        %778 = vrot.lane.b32.xlu0 %v630, 32
        %v779 = vpop.permute.xlu0 %778
        %v781 = vrot.slane %v776, 4
        %vm782 = vcmask 1047556
        %v783 = vsel %vm782, %v781, %v630
        %v784 = vrot.slane %v630, 4
        %v785 = vsel %vm782, %v776, %v784
        %v787 = vunpack.c.l.s4 1983009808
        %v788 = vunpack.c.0.s8 %v787
        %v789 = vperm.slane %v783, %v788
        %v791 = vunpack.c.l.s4 1983009808
        %v792 = vunpack.c.0.s8 %v791
        %v793 = vperm.slane %v785, %v792
        %v794 = vrot.slane %v779, 4
        %v795 = vsel %vm782, %v794, %v773
        %v796 = vrot.slane %v773, 4
        %v797 = vsel %vm782, %v779, %v796
        %v799 = vunpack.c.l.s4 1983009808
        %v800 = vunpack.c.0.s8 %v799
        %v801 = vperm.slane %v795, %v800
        %v803 = vunpack.c.l.s4 1983009808
        %v804 = vunpack.c.0.s8 %v803
        %v805 = vperm.slane %v797, %v804
        %v806 = vrot.slane %v801, 4
        %v807 = vsel %vm782, %v806, %v789
        %v808 = vrot.slane %v789, 4
        %v809 = vsel %vm782, %v801, %v808
        %v811 = vunpack.c.l.s4 1934713408
        %v812 = vunpack.c.0.s8 %v811
        %v813 = vperm.slane %v807, %v812
        %v815 = vunpack.c.l.s4 1934713408
        %v816 = vunpack.c.0.s8 %v815
        %v817 = vperm.slane %v809, %v816
        %v818 = vrot.slane %v805, 4
        %v819 = vsel %vm782, %v818, %v793
        %v820 = vrot.slane %v793, 4
        %v821 = vsel %vm782, %v805, %v820
        %v823 = vunpack.c.l.s4 1934713408
        %v824 = vunpack.c.0.s8 %v823
        %v825 = vperm.slane %v819, %v824
        %v827 = vunpack.c.l.s4 1934713408
        %v828 = vunpack.c.0.s8 %v827
        %v829 = vperm.slane %v821, %v828
        %v830 = vrot.slane %v813, 4
        %v831 = vsel %vm782, 0.0, %v830
        %v832 = vrot.slane %v817, 4
        %v833 = vsel %vm782, 0.0, %v832
        %v834 = vrot.slane %v825, 4
        %v835 = vsel %vm782, 0.0, %v834
        %v836 = vrot.slane %v829, 4
        %v837 = vsel %vm782, 0.0, %v836
        %v838 = vsel %vm782, %v832, %v813
        %v840 = vunpack.c.l.s4 1983009808
        %v841 = vunpack.c.0.s8 %v840
        %v842 = vperm.slane %v838, %v841
        %v843 = vrot.slane %v833, 4
        %v844 = vsel %vm782, %v843, %v831
        %v846 = vunpack.c.l.s4 1983009808
        %v847 = vunpack.c.0.s8 %v846
        %v848 = vperm.slane %v844, %v847
        %v849 = vsel %vm782, %v836, %v825
        %v851 = vunpack.c.l.s4 1983009808
        %v852 = vunpack.c.0.s8 %v851
        %v853 = vperm.slane %v849, %v852
        %v854 = vrot.slane %v837, 4
        %v855 = vsel %vm782, %v854, %v835
        %v857 = vunpack.c.l.s4 1983009808
        %v858 = vunpack.c.0.s8 %v857
        %v859 = vperm.slane %v855, %v858
        %v860 = vrot.slane %v848, 4
        %v861 = vsel %vm782, %v860, %v842
        %v862 = vrot.slane %v842, 4
        %v863 = vsel %vm782, %v848, %v862
        %v865 = vunpack.c.l.s4 1934713408
        %v866 = vunpack.c.0.s8 %v865
        %v867 = vperm.slane %v861, %v866
        %v869 = vunpack.c.l.s4 1934713408
        %v870 = vunpack.c.0.s8 %v869
        %v871 = vperm.slane %v863, %v870
        %v872 = vrot.slane %v859, 4
        %v873 = vsel %vm782, %v872, %v853
        %v874 = vrot.slane %v853, 4
        %v875 = vsel %vm782, %v859, %v874
        %v877 = vunpack.c.l.s4 1934713408
        %v878 = vunpack.c.0.s8 %v877
        %v879 = vperm.slane %v873, %v878
        %v881 = vunpack.c.l.s4 1934713408
        %v882 = vunpack.c.0.s8 %v881
        %v883 = vperm.slane %v875, %v882
        %v884 = vrot.slane %v879, 4
        %v885 = vsel %vm782, %v884, %v867
        %v886 = vrot.slane %v867, 4
        %v887 = vsel %vm782, %v879, %v886
        %v888 = vrot.slane %v883, 4
        %v889 = vsel %vm782, %v888, %v871
        %v890 = vrot.slane %v871, 4
        %v891 = vsel %vm782, %v883, %v890
        %v892 = vpack.c.bf16 %v885, %v885
        %v893 = vpack.c.bf16 %v887, %v887
        %v894 = vpack.c.bf16 %v889, %v889
        %v895 = vpack.c.bf16 %v891, %v891
        %898 = vrot.lane.b32.xlu0 %v766, 96
        %v899 = vpop.permute.xlu0 %898
        %900 = vrot.lane.b32.xlu0 %v767, 96
        %v901 = vpop.permute.xlu0 %900
        %904 = vrot.lane.b32.xlu0 %v766, 64
        %v905 = vpop.permute.xlu0 %904
        %906 = vrot.lane.b32.xlu0 %v767, 64
        %v907 = vpop.permute.xlu0 %906
        %910 = vrot.lane.b32.xlu0 %v766, 32
        %v911 = vpop.permute.xlu0 %910
        %912 = vrot.lane.b32.xlu0 %v767, 32
        %v913 = vpop.permute.xlu0 %912
        %v916 = vrot.slane %v905, 4
        %v917 = vsel %vm782, %v916, %v766
        %v918 = vrot.slane %v766, 4
        %v919 = vsel %vm782, %v905, %v918
        %v921 = vunpack.c.l.s4 1983009808
        %v922 = vunpack.c.0.s8 %v921
        %v923 = vperm.slane %v917, %v922
        %v925 = vunpack.c.l.s4 1983009808
        %v926 = vunpack.c.0.s8 %v925
        %v927 = vperm.slane %v919, %v926
        %v928 = vrot.slane %v911, 4
        %v929 = vsel %vm782, %v928, %v899
        %v930 = vrot.slane %v899, 4
        %v931 = vsel %vm782, %v911, %v930
        %v933 = vunpack.c.l.s4 1983009808
        %v934 = vunpack.c.0.s8 %v933
        %v935 = vperm.slane %v929, %v934
        %v937 = vunpack.c.l.s4 1983009808
        %v938 = vunpack.c.0.s8 %v937
        %v939 = vperm.slane %v931, %v938
        %v940 = vrot.slane %v935, 4
        %v941 = vsel %vm782, %v940, %v923
        %v942 = vrot.slane %v923, 4
        %v943 = vsel %vm782, %v935, %v942
        %v945 = vunpack.c.l.s4 1934713408
        %v946 = vunpack.c.0.s8 %v945
        %v947 = vperm.slane %v941, %v946
        %v949 = vunpack.c.l.s4 1934713408
        %v950 = vunpack.c.0.s8 %v949
        %v951 = vperm.slane %v943, %v950
        %v952 = vrot.slane %v939, 4
        %v953 = vsel %vm782, %v952, %v927
        %v954 = vrot.slane %v927, 4
        %v955 = vsel %vm782, %v939, %v954
        %v957 = vunpack.c.l.s4 1934713408
        %v958 = vunpack.c.0.s8 %v957
        %v959 = vperm.slane %v953, %v958
        %v961 = vunpack.c.l.s4 1934713408
        %v962 = vunpack.c.0.s8 %v961
        %v963 = vperm.slane %v955, %v962
        %v964 = vrot.slane %v947, 4
        %v965 = vsel %vm782, 0.0, %v964
        %v966 = vrot.slane %v951, 4
        %v967 = vsel %vm782, 0.0, %v966
        %v968 = vrot.slane %v959, 4
        %v969 = vsel %vm782, 0.0, %v968
        %v970 = vrot.slane %v963, 4
        %v971 = vsel %vm782, 0.0, %v970
        %v972 = vrot.slane %v907, 4
        %v973 = vsel %vm782, %v972, %v767
        %v974 = vrot.slane %v767, 4
        %v975 = vsel %vm782, %v907, %v974
        %v977 = vunpack.c.l.s4 1983009808
        %v978 = vunpack.c.0.s8 %v977
        %v979 = vperm.slane %v973, %v978
        %v981 = vunpack.c.l.s4 1983009808
        %v982 = vunpack.c.0.s8 %v981
        %v983 = vperm.slane %v975, %v982
        %v984 = vrot.slane %v913, 4
        %v985 = vsel %vm782, %v984, %v901
        %v986 = vrot.slane %v901, 4
        %v987 = vsel %vm782, %v913, %v986
        %v989 = vunpack.c.l.s4 1983009808
        %v990 = vunpack.c.0.s8 %v989
        %v991 = vperm.slane %v985, %v990
        %v993 = vunpack.c.l.s4 1983009808
        %v994 = vunpack.c.0.s8 %v993
        %v995 = vperm.slane %v987, %v994
        %v996 = vrot.slane %v991, 4
        %v997 = vsel %vm782, %v996, %v979
        %v998 = vrot.slane %v979, 4
        %v999 = vsel %vm782, %v991, %v998
        %v1001 = vunpack.c.l.s4 1934713408
        %v1002 = vunpack.c.0.s8 %v1001
        %v1003 = vperm.slane %v997, %v1002
        %v1005 = vunpack.c.l.s4 1934713408
        %v1006 = vunpack.c.0.s8 %v1005
        %v1007 = vperm.slane %v999, %v1006
        %v1008 = vrot.slane %v995, 4
        %v1009 = vsel %vm782, %v1008, %v983
        %v1010 = vrot.slane %v983, 4
        %v1011 = vsel %vm782, %v995, %v1010
        %v1013 = vunpack.c.l.s4 1934713408
        %v1014 = vunpack.c.0.s8 %v1013
        %v1015 = vperm.slane %v1009, %v1014
        %v1017 = vunpack.c.l.s4 1934713408
        %v1018 = vunpack.c.0.s8 %v1017
        %v1019 = vperm.slane %v1011, %v1018
        %v1020 = vrot.slane %v1003, 4
        %v1021 = vsel %vm782, 0.0, %v1020
        %v1022 = vrot.slane %v1007, 4
        %v1023 = vsel %vm782, 0.0, %v1022
        %v1024 = vrot.slane %v1015, 4
        %v1025 = vsel %vm782, 0.0, %v1024
        %v1026 = vrot.slane %v1019, 4
        %v1027 = vsel %vm782, 0.0, %v1026
        %v1028 = vsel %vm782, %v966, %v947
        %v1030 = vunpack.c.l.s4 1983009808
        %v1031 = vunpack.c.0.s8 %v1030
        %v1032 = vperm.slane %v1028, %v1031
        %v1033 = vrot.slane %v967, 4
        %v1034 = vsel %vm782, %v1033, %v965
        %v1036 = vunpack.c.l.s4 1983009808
        %v1037 = vunpack.c.0.s8 %v1036
        %v1038 = vperm.slane %v1034, %v1037
        %v1039 = vsel %vm782, %v970, %v959
        %v1041 = vunpack.c.l.s4 1983009808
        %v1042 = vunpack.c.0.s8 %v1041
        %v1043 = vperm.slane %v1039, %v1042
        %v1044 = vrot.slane %v971, 4
        %v1045 = vsel %vm782, %v1044, %v969
        %v1047 = vunpack.c.l.s4 1983009808
        %v1048 = vunpack.c.0.s8 %v1047
        %v1049 = vperm.slane %v1045, %v1048
        %v1050 = vrot.slane %v1038, 4
        %v1051 = vsel %vm782, %v1050, %v1032
        %v1052 = vrot.slane %v1032, 4
        %v1053 = vsel %vm782, %v1038, %v1052
        %v1055 = vunpack.c.l.s4 1934713408
        %v1056 = vunpack.c.0.s8 %v1055
        %v1057 = vperm.slane %v1051, %v1056
        %v1059 = vunpack.c.l.s4 1934713408
        %v1060 = vunpack.c.0.s8 %v1059
        %v1061 = vperm.slane %v1053, %v1060
        %v1062 = vrot.slane %v1049, 4
        %v1063 = vsel %vm782, %v1062, %v1043
        %v1064 = vrot.slane %v1043, 4
        %v1065 = vsel %vm782, %v1049, %v1064
        %v1067 = vunpack.c.l.s4 1934713408
        %v1068 = vunpack.c.0.s8 %v1067
        %v1069 = vperm.slane %v1063, %v1068
        %v1071 = vunpack.c.l.s4 1934713408
        %v1072 = vunpack.c.0.s8 %v1071
        %v1073 = vperm.slane %v1065, %v1072
        %v1074 = vrot.slane %v1069, 4
        %v1075 = vsel %vm782, %v1074, %v1057
        %v1076 = vrot.slane %v1057, 4
        %v1077 = vsel %vm782, %v1069, %v1076
        %v1078 = vrot.slane %v1073, 4
        %v1079 = vsel %vm782, %v1078, %v1061
        %v1080 = vrot.slane %v1061, 4
        %v1081 = vsel %vm782, %v1073, %v1080
        %v1082 = vsel %vm782, %v1022, %v1003
        %v1084 = vunpack.c.l.s4 1983009808
        %v1085 = vunpack.c.0.s8 %v1084
        %v1086 = vperm.slane %v1082, %v1085
        %v1087 = vrot.slane %v1023, 4
        %v1088 = vsel %vm782, %v1087, %v1021
        %v1090 = vunpack.c.l.s4 1983009808
        %v1091 = vunpack.c.0.s8 %v1090
        %v1092 = vperm.slane %v1088, %v1091
        %v1093 = vsel %vm782, %v1026, %v1015
        %v1095 = vunpack.c.l.s4 1983009808
        %v1096 = vunpack.c.0.s8 %v1095
        %v1097 = vperm.slane %v1093, %v1096
        %v1098 = vrot.slane %v1027, 4
        %v1099 = vsel %vm782, %v1098, %v1025
        %v1101 = vunpack.c.l.s4 1983009808
        %v1102 = vunpack.c.0.s8 %v1101
        %v1103 = vperm.slane %v1099, %v1102
        %v1104 = vrot.slane %v1092, 4
        %v1105 = vsel %vm782, %v1104, %v1086
        %v1106 = vrot.slane %v1086, 4
        %v1107 = vsel %vm782, %v1092, %v1106
        %v1109 = vunpack.c.l.s4 1934713408
        %v1110 = vunpack.c.0.s8 %v1109
        %v1111 = vperm.slane %v1105, %v1110
        %v1113 = vunpack.c.l.s4 1934713408
        %v1114 = vunpack.c.0.s8 %v1113
        %v1115 = vperm.slane %v1107, %v1114
        %v1116 = vrot.slane %v1103, 4
        %v1117 = vsel %vm782, %v1116, %v1097
        %v1118 = vrot.slane %v1097, 4
        %v1119 = vsel %vm782, %v1103, %v1118
        %v1121 = vunpack.c.l.s4 1934713408
        %v1122 = vunpack.c.0.s8 %v1121
        %v1123 = vperm.slane %v1117, %v1122
        %v1125 = vunpack.c.l.s4 1934713408
        %v1126 = vunpack.c.0.s8 %v1125
        %v1127 = vperm.slane %v1119, %v1126
        %v1128 = vrot.slane %v1123, 4
        %v1129 = vsel %vm782, %v1128, %v1111
        %v1130 = vrot.slane %v1111, 4
        %v1131 = vsel %vm782, %v1123, %v1130
        %v1132 = vrot.slane %v1127, 4
        %v1133 = vsel %vm782, %v1132, %v1115
        %v1134 = vrot.slane %v1115, 4
        %v1135 = vsel %vm782, %v1127, %v1134
        %v1136 = vpack.c.bf16 %v1075, %v1075
        %v1137 = vpack.c.bf16 %v1129, %v1129
        %v1138 = vpack.c.bf16 %v1077, %v1077
        %v1139 = vpack.c.bf16 %v1131, %v1131
        %v1140 = vpack.c.bf16 %v1079, %v1079
        %v1141 = vpack.c.bf16 %v1133, %v1133
        %v1142 = vpack.c.bf16 %v1081, %v1081
        %v1143 = vpack.c.bf16 %v1135, %v1135
        %1146 = vrot.lane.b32.xlu0 %v769, 96
        %v1147 = vpop.permute.xlu0 %1146
        %1148 = vrot.lane.b32.xlu0 %v770, 96
        %v1149 = vpop.permute.xlu0 %1148
        %1152 = vrot.lane.b32.xlu0 %v769, 64
        %v1153 = vpop.permute.xlu0 %1152
        %1154 = vrot.lane.b32.xlu0 %v770, 64
        %v1155 = vpop.permute.xlu0 %1154
        %1158 = vrot.lane.b32.xlu0 %v769, 32
        %v1159 = vpop.permute.xlu0 %1158
        %1160 = vrot.lane.b32.xlu0 %v770, 32
        %v1161 = vpop.permute.xlu0 %1160
        %v1164 = vrot.slane %v1153, 4
        %v1165 = vsel %vm782, %v1164, %v769
        %v1166 = vrot.slane %v769, 4
        %v1167 = vsel %vm782, %v1153, %v1166
        %v1169 = vunpack.c.l.s4 1983009808
        %v1170 = vunpack.c.0.s8 %v1169
        %v1171 = vperm.slane %v1165, %v1170
        %v1173 = vunpack.c.l.s4 1983009808
        %v1174 = vunpack.c.0.s8 %v1173
        %v1175 = vperm.slane %v1167, %v1174
        %v1176 = vrot.slane %v1159, 4
        %v1177 = vsel %vm782, %v1176, %v1147
        %v1178 = vrot.slane %v1147, 4
        %v1179 = vsel %vm782, %v1159, %v1178
        %v1181 = vunpack.c.l.s4 1983009808
        %v1182 = vunpack.c.0.s8 %v1181
        %v1183 = vperm.slane %v1177, %v1182
        %v1185 = vunpack.c.l.s4 1983009808
        %v1186 = vunpack.c.0.s8 %v1185
        %v1187 = vperm.slane %v1179, %v1186
        %v1188 = vrot.slane %v1183, 4
        %v1189 = vsel %vm782, %v1188, %v1171
        %v1190 = vrot.slane %v1171, 4
        %v1191 = vsel %vm782, %v1183, %v1190
        %v1193 = vunpack.c.l.s4 1934713408
        %v1194 = vunpack.c.0.s8 %v1193
        %v1195 = vperm.slane %v1189, %v1194
        %v1197 = vunpack.c.l.s4 1934713408
        %v1198 = vunpack.c.0.s8 %v1197
        %v1199 = vperm.slane %v1191, %v1198
        %v1200 = vrot.slane %v1187, 4
        %v1201 = vsel %vm782, %v1200, %v1175
        %v1202 = vrot.slane %v1175, 4
        %v1203 = vsel %vm782, %v1187, %v1202
        %v1205 = vunpack.c.l.s4 1934713408
        %v1206 = vunpack.c.0.s8 %v1205
        %v1207 = vperm.slane %v1201, %v1206
        %v1209 = vunpack.c.l.s4 1934713408
        %v1210 = vunpack.c.0.s8 %v1209
        %v1211 = vperm.slane %v1203, %v1210
        %v1212 = vrot.slane %v1195, 4
        %v1213 = vsel %vm782, 0.0, %v1212
        %v1214 = vrot.slane %v1199, 4
        %v1215 = vsel %vm782, 0.0, %v1214
        %v1216 = vrot.slane %v1207, 4
        %v1217 = vsel %vm782, 0.0, %v1216
        %v1218 = vrot.slane %v1211, 4
        %v1219 = vsel %vm782, 0.0, %v1218
        %v1220 = vrot.slane %v1155, 4
        %v1221 = vsel %vm782, %v1220, %v770
        %v1222 = vrot.slane %v770, 4
        %v1223 = vsel %vm782, %v1155, %v1222
        %v1225 = vunpack.c.l.s4 1983009808
        %v1226 = vunpack.c.0.s8 %v1225
        %v1227 = vperm.slane %v1221, %v1226
        %v1229 = vunpack.c.l.s4 1983009808
        %v1230 = vunpack.c.0.s8 %v1229
        %v1231 = vperm.slane %v1223, %v1230
        %v1232 = vrot.slane %v1161, 4
        %v1233 = vsel %vm782, %v1232, %v1149
        %v1234 = vrot.slane %v1149, 4
        %v1235 = vsel %vm782, %v1161, %v1234
        %v1237 = vunpack.c.l.s4 1983009808
        %v1238 = vunpack.c.0.s8 %v1237
        %v1239 = vperm.slane %v1233, %v1238
        %v1241 = vunpack.c.l.s4 1983009808
        %v1242 = vunpack.c.0.s8 %v1241
        %v1243 = vperm.slane %v1235, %v1242
        %v1244 = vrot.slane %v1239, 4
        %v1245 = vsel %vm782, %v1244, %v1227
        %v1246 = vrot.slane %v1227, 4
        %v1247 = vsel %vm782, %v1239, %v1246
        %v1249 = vunpack.c.l.s4 1934713408
        %v1250 = vunpack.c.0.s8 %v1249
        %v1251 = vperm.slane %v1245, %v1250
        %v1253 = vunpack.c.l.s4 1934713408
        %v1254 = vunpack.c.0.s8 %v1253
        %v1255 = vperm.slane %v1247, %v1254
        %v1256 = vrot.slane %v1243, 4
        %v1257 = vsel %vm782, %v1256, %v1231
        %v1258 = vrot.slane %v1231, 4
        %v1259 = vsel %vm782, %v1243, %v1258
        %v1261 = vunpack.c.l.s4 1934713408
        %v1262 = vunpack.c.0.s8 %v1261
        %v1263 = vperm.slane %v1257, %v1262
        %v1265 = vunpack.c.l.s4 1934713408
        %v1266 = vunpack.c.0.s8 %v1265
        %v1267 = vperm.slane %v1259, %v1266
        %v1268 = vrot.slane %v1251, 4
        %v1269 = vsel %vm782, 0.0, %v1268
        %v1270 = vrot.slane %v1255, 4
        %v1271 = vsel %vm782, 0.0, %v1270
        %v1272 = vrot.slane %v1263, 4
        %v1273 = vsel %vm782, 0.0, %v1272
        %v1274 = vrot.slane %v1267, 4
        %v1275 = vsel %vm782, 0.0, %v1274
        %v1276 = vsel %vm782, %v1214, %v1195
        %v1278 = vunpack.c.l.s4 1983009808
        %v1279 = vunpack.c.0.s8 %v1278
        %v1280 = vperm.slane %v1276, %v1279
        %v1281 = vrot.slane %v1215, 4
        %v1282 = vsel %vm782, %v1281, %v1213
        %v1284 = vunpack.c.l.s4 1983009808
        %v1285 = vunpack.c.0.s8 %v1284
        %v1286 = vperm.slane %v1282, %v1285
        %v1287 = vsel %vm782, %v1218, %v1207
        %v1289 = vunpack.c.l.s4 1983009808
        %v1290 = vunpack.c.0.s8 %v1289
        %v1291 = vperm.slane %v1287, %v1290
        %v1292 = vrot.slane %v1219, 4
        %v1293 = vsel %vm782, %v1292, %v1217
        %v1295 = vunpack.c.l.s4 1983009808
        %v1296 = vunpack.c.0.s8 %v1295
        %v1297 = vperm.slane %v1293, %v1296
        %v1298 = vrot.slane %v1286, 4
        %v1299 = vsel %vm782, %v1298, %v1280
        %v1300 = vrot.slane %v1280, 4
        %v1301 = vsel %vm782, %v1286, %v1300
        %v1303 = vunpack.c.l.s4 1934713408
        %v1304 = vunpack.c.0.s8 %v1303
        %v1305 = vperm.slane %v1299, %v1304
        %v1307 = vunpack.c.l.s4 1934713408
        %v1308 = vunpack.c.0.s8 %v1307
        %v1309 = vperm.slane %v1301, %v1308
        %v1310 = vrot.slane %v1297, 4
        %v1311 = vsel %vm782, %v1310, %v1291
        %v1312 = vrot.slane %v1291, 4
        %v1313 = vsel %vm782, %v1297, %v1312
        %v1315 = vunpack.c.l.s4 1934713408
        %v1316 = vunpack.c.0.s8 %v1315
        %v1317 = vperm.slane %v1311, %v1316
        %v1319 = vunpack.c.l.s4 1934713408
        %v1320 = vunpack.c.0.s8 %v1319
        %v1321 = vperm.slane %v1313, %v1320
        %v1322 = vrot.slane %v1317, 4
        %v1323 = vsel %vm782, %v1322, %v1305
        %v1324 = vrot.slane %v1305, 4
        %v1325 = vsel %vm782, %v1317, %v1324
        %v1326 = vrot.slane %v1321, 4
        %v1327 = vsel %vm782, %v1326, %v1309
        %v1328 = vrot.slane %v1309, 4
        %v1329 = vsel %vm782, %v1321, %v1328
        %v1330 = vsel %vm782, %v1270, %v1251
        %v1332 = vunpack.c.l.s4 1983009808
        %v1333 = vunpack.c.0.s8 %v1332
        %v1334 = vperm.slane %v1330, %v1333
        %v1335 = vrot.slane %v1271, 4
        %v1336 = vsel %vm782, %v1335, %v1269
        %v1338 = vunpack.c.l.s4 1983009808
        %v1339 = vunpack.c.0.s8 %v1338
        %v1340 = vperm.slane %v1336, %v1339
        %v1341 = vsel %vm782, %v1274, %v1263
        %v1343 = vunpack.c.l.s4 1983009808
        %v1344 = vunpack.c.0.s8 %v1343
        %v1345 = vperm.slane %v1341, %v1344
        %v1346 = vrot.slane %v1275, 4
        %v1347 = vsel %vm782, %v1346, %v1273
        %v1349 = vunpack.c.l.s4 1983009808
        %v1350 = vunpack.c.0.s8 %v1349
        %v1351 = vperm.slane %v1347, %v1350
        %v1352 = vrot.slane %v1340, 4
        %v1353 = vsel %vm782, %v1352, %v1334
        %v1354 = vrot.slane %v1334, 4
        %v1355 = vsel %vm782, %v1340, %v1354
        %v1357 = vunpack.c.l.s4 1934713408
        %v1358 = vunpack.c.0.s8 %v1357
        %v1359 = vperm.slane %v1353, %v1358
        %v1361 = vunpack.c.l.s4 1934713408
        %v1362 = vunpack.c.0.s8 %v1361
        %v1363 = vperm.slane %v1355, %v1362
        %v1364 = vrot.slane %v1351, 4
        %v1365 = vsel %vm782, %v1364, %v1345
        %v1366 = vrot.slane %v1345, 4
        %v1367 = vsel %vm782, %v1351, %v1366
        %v1369 = vunpack.c.l.s4 1934713408
        %v1370 = vunpack.c.0.s8 %v1369
        %v1371 = vperm.slane %v1365, %v1370
        %v1373 = vunpack.c.l.s4 1934713408
        %v1374 = vunpack.c.0.s8 %v1373
        %v1375 = vperm.slane %v1367, %v1374
        %v1376 = vrot.slane %v1371, 4
        %v1377 = vsel %vm782, %v1376, %v1359
        %v1378 = vrot.slane %v1359, 4
        %v1379 = vsel %vm782, %v1371, %v1378
        %v1380 = vrot.slane %v1375, 4
        %v1381 = vsel %vm782, %v1380, %v1363
        %v1382 = vrot.slane %v1363, 4
        %v1383 = vsel %vm782, %v1375, %v1382
        %v1384 = vpack.c.bf16 %v1323, %v1323
        %v1385 = vpack.c.bf16 %v1377, %v1377
        %v1386 = vpack.c.bf16 %v1325, %v1325
        %v1387 = vpack.c.bf16 %v1379, %v1379
        %v1388 = vpack.c.bf16 %v1327, %v1327
        %v1389 = vpack.c.bf16 %v1381, %v1381
        %v1390 = vpack.c.bf16 %v1329, %v1329
        %v1391 = vpack.c.bf16 %v1383, %v1383
        %v1392 = vld [vmem:[%s473] sm:$0x1]
        %v1394 = vperm.slane %v1392, 0
        %v1398 = vunpack.c.l.b16 %v1136
        %v1399 = vunpack.c.l.b16 %v1137
        %v1400 = vpack.c.b16 %v1399, %v1398
        %vm1401 = vcmask 261120
        %v1403 = vsel %vm1401, %v892, 0
        %v1406 = vsel %vm1401, %v1400, 0
        %1408 = vmatpush.bf16.xpose.msra.mxu0 0
        %1409 = vmatpush.bf16.xpose.msra.mxu0 0
        %1410 = vmatpush.bf16.xpose.msra.mxu0 0
        %1411 = vmatpush.bf16.xpose.msra.mxu0 0
        %1412 = vmatpush.bf16.xpose.msra.mxu0 0
        %1413 = vmatpush.bf16.xpose.msra.mxu0 0
        %1414 = vmatpush.bf16.xpose.msra.mxu0 0
        %1415 = vmatpush.bf16.xpose.msra.mxu0 %v1406
        %1416 = vmatmul.bf16.gmra.mxu0 %v1403
        %v1417 = vpop.f32.mrf.mxu0
        %v1418 = vadd.f32 %v1394, %v1417
        %v1419 = vpop.f32.mrf.mxu0
        %1420 = vdwg.mxu0
        %v1423 = vunpack.c.l.b16 %v1138
        %v1424 = vunpack.c.l.b16 %v1139
        %v1425 = vpack.c.b16 %v1424, %v1423
        %v1427 = vsel %vm1401, %v893, 0
        %v1430 = vsel %vm1401, %v1425, 0
        %1432 = vmatpush.bf16.xpose.msra.mxu0 0
        %1433 = vmatpush.bf16.xpose.msra.mxu0 0
        %1434 = vmatpush.bf16.xpose.msra.mxu0 0
        %1435 = vmatpush.bf16.xpose.msra.mxu0 0
        %1436 = vmatpush.bf16.xpose.msra.mxu0 0
        %1437 = vmatpush.bf16.xpose.msra.mxu0 0
        %1438 = vmatpush.bf16.xpose.msra.mxu0 0
        %1439 = vmatpush.bf16.xpose.msra.mxu0 %v1430
        %1440 = vmatmul.bf16.gmra.mxu0 %v1427
        %v1441 = vpop.f32.mrf.mxu0
        %v1442 = vadd.f32 %v1394, %v1441
        %v1443 = vpop.f32.mrf.mxu0
        %1444 = vdwg.mxu0
        %v1447 = vunpack.c.l.b16 %v1140
        %v1448 = vunpack.c.l.b16 %v1141
        %v1449 = vpack.c.b16 %v1448, %v1447
        %v1451 = vsel %vm1401, %v894, 0
        %v1454 = vsel %vm1401, %v1449, 0
        %1456 = vmatpush.bf16.xpose.msra.mxu0 0
        %1457 = vmatpush.bf16.xpose.msra.mxu0 0
        %1458 = vmatpush.bf16.xpose.msra.mxu0 0
        %1459 = vmatpush.bf16.xpose.msra.mxu0 0
        %1460 = vmatpush.bf16.xpose.msra.mxu0 0
        %1461 = vmatpush.bf16.xpose.msra.mxu0 0
        %1462 = vmatpush.bf16.xpose.msra.mxu0 0
        %1463 = vmatpush.bf16.xpose.msra.mxu0 %v1454
        %1464 = vmatmul.bf16.gmra.mxu0 %v1451
        %v1465 = vpop.f32.mrf.mxu0
        %v1466 = vadd.f32 %v1394, %v1465
        %v1467 = vpop.f32.mrf.mxu0
        %1468 = vdwg.mxu0
        %v1471 = vunpack.c.l.b16 %v1142
        %v1472 = vunpack.c.l.b16 %v1143
        %v1473 = vpack.c.b16 %v1472, %v1471
        %v1475 = vsel %vm1401, %v895, 0
        %v1478 = vsel %vm1401, %v1473, 0
        %1480 = vmatpush.bf16.xpose.msra.mxu0 0
        %1481 = vmatpush.bf16.xpose.msra.mxu0 0
        %1482 = vmatpush.bf16.xpose.msra.mxu0 0
        %1483 = vmatpush.bf16.xpose.msra.mxu0 0
        %1484 = vmatpush.bf16.xpose.msra.mxu0 0
        %1485 = vmatpush.bf16.xpose.msra.mxu0 0
        %1486 = vmatpush.bf16.xpose.msra.mxu0 0
        %1487 = vmatpush.bf16.xpose.msra.mxu0 %v1478
        %1488 = vmatmul.bf16.gmra.mxu0 %v1475
        %v1489 = vpop.f32.mrf.mxu0
        %v1490 = vadd.f32 %v1394, %v1489
        %v1491 = vpop.f32.mrf.mxu0
        %1492 = vdwg.mxu0
        %vm1493 = vcmask 130048
        %v1494 = vsel %vm1493, %v1418, -inf
        %1495 = vmax.xlane.f32.xlu0 %v1494
        %v1496 = vpop.xlane.xlu0 %1495
        %v1497 = vsel %vm1493, %v1442, -inf
        %1498 = vmax.xlane.f32.xlu0 %v1497
        %v1499 = vpop.xlane.xlu0 %1498
        %v1500 = vsel %vm1493, %v1466, -inf
        %1501 = vmax.xlane.f32.xlu0 %v1500
        %v1502 = vpop.xlane.xlu0 %1501
        %v1503 = vsel %vm1493, %v1490, -inf
        %1504 = vmax.xlane.f32.xlu0 %v1503
        %v1505 = vpop.xlane.xlu0 %1504
        %v1506 = vsub.f32 %v1418, %v1496
        %v1507 = vsub.f32 %v1442, %v1499
        %v1508 = vsub.f32 %v1466, %v1502
        %v1509 = vsub.f32 %v1490, %v1505
        %v1510 = vmul.f32 %v1506, 1.442695
        %v1511 = vpow.pop %v1510
        %v1512 = vmul.f32 %v1507, 1.442695
        %v1513 = vpow.pop %v1512
        %v1514 = vmul.f32 %v1508, 1.442695
        %v1515 = vpow.pop %v1514
        %v1516 = vmul.f32 %v1509, 1.442695
        %v1517 = vpow.pop %v1516
        %v1518 = vsel %vm1493, %v1511, 0.0
        %1519 = vadd.xlane.f32.xlu0 %v1518
        %v1520 = vpop.xlane.xlu0 %1519
        %v1521 = vsel %vm1493, %v1513, 0.0
        %1522 = vadd.xlane.f32.xlu0 %v1521
        %v1523 = vpop.xlane.xlu0 %1522
        %v1524 = vsel %vm1493, %v1515, 0.0
        %1525 = vadd.xlane.f32.xlu0 %v1524
        %v1526 = vpop.xlane.xlu0 %1525
        %v1527 = vsel %vm1493, %v1517, 0.0
        %1528 = vadd.xlane.f32.xlu0 %v1527
        %v1529 = vpop.xlane.xlu0 %1528
        %v1530 = vrcp.pop %v1520
        %v1531 = vrcp.pop %v1523
        %v1532 = vrcp.pop %v1526
        %v1533 = vrcp.pop %v1529
        %v1534 = vmul.f32 %v1511, %v1530
        %v1535 = vmul.f32 %v1513, %v1531
        %v1536 = vmul.f32 %v1515, %v1532
        %v1537 = vmul.f32 %v1517, %v1533
        %v1538 = vpack.c.bf16 %v1534, %v1534
        %v1539 = vpack.c.bf16 %v1535, %v1535
        %v1540 = vpack.c.bf16 %v1536, %v1536
        %v1541 = vpack.c.bf16 %v1537, %v1537
        %v1544 = vunpack.c.l.b16 %v1384
        %v1545 = vunpack.c.l.b16 %v1385
        %v1546 = vpack.c.b16 %v1545, %v1544
        %v1549 = vsel %vm1493, %v1538, 0
        %1551 = vmatpush.bf16.msra.mxu0 0
        %1552 = vmatpush.bf16.msra.mxu0 0
        %1553 = vmatpush.bf16.msra.mxu0 0
        %1554 = vmatpush.bf16.msra.mxu0 0
        %1555 = vmatpush.bf16.msra.mxu0 0
        %1556 = vmatpush.bf16.msra.mxu0 0
        %1557 = vmatpush.bf16.msra.mxu0 0
        %1558 = vmatpush.bf16.msra.mxu0 %v1546
        %1559 = vmatmul.bf16.gmra.mxu0 %v1549
        %v1560 = vpop.f32.mrf.mxu0
        %v1561 = vadd.f32 0.0, %v1560
        %v1562 = vpop.f32.mrf.mxu0
        %1563 = vdwg.mxu0
        %v1566 = vunpack.c.l.b16 %v1386
        %v1567 = vunpack.c.l.b16 %v1387
        %v1568 = vpack.c.b16 %v1567, %v1566
        %v1571 = vsel %vm1493, %v1539, 0
        %1573 = vmatpush.bf16.msra.mxu0 0
        %1574 = vmatpush.bf16.msra.mxu0 0
        %1575 = vmatpush.bf16.msra.mxu0 0
        %1576 = vmatpush.bf16.msra.mxu0 0
        %1577 = vmatpush.bf16.msra.mxu0 0
        %1578 = vmatpush.bf16.msra.mxu0 0
        %1579 = vmatpush.bf16.msra.mxu0 0
        %1580 = vmatpush.bf16.msra.mxu0 %v1568
        %1581 = vmatmul.bf16.gmra.mxu0 %v1571
        %v1582 = vpop.f32.mrf.mxu0
        %v1583 = vadd.f32 0.0, %v1582
        %v1584 = vpop.f32.mrf.mxu0
        %1585 = vdwg.mxu0
        %v1588 = vunpack.c.l.b16 %v1388
        %v1589 = vunpack.c.l.b16 %v1389
        %v1590 = vpack.c.b16 %v1589, %v1588
        %v1593 = vsel %vm1493, %v1540, 0
        %1595 = vmatpush.bf16.msra.mxu0 0
        %1596 = vmatpush.bf16.msra.mxu0 0
        %1597 = vmatpush.bf16.msra.mxu0 0
        %1598 = vmatpush.bf16.msra.mxu0 0
        %1599 = vmatpush.bf16.msra.mxu0 0
        %1600 = vmatpush.bf16.msra.mxu0 0
        %1601 = vmatpush.bf16.msra.mxu0 0
        %1602 = vmatpush.bf16.msra.mxu0 %v1590
        %1603 = vmatmul.bf16.gmra.mxu0 %v1593
        %v1604 = vpop.f32.mrf.mxu0
        %v1605 = vadd.f32 0.0, %v1604
        %v1606 = vpop.f32.mrf.mxu0
        %1607 = vdwg.mxu0
        %v1610 = vunpack.c.l.b16 %v1390
        %v1611 = vunpack.c.l.b16 %v1391
        %v1612 = vpack.c.b16 %v1611, %v1610
        %v1615 = vsel %vm1493, %v1541, 0
        %1617 = vmatpush.bf16.msra.mxu0 0
        %1618 = vmatpush.bf16.msra.mxu0 0
        %1619 = vmatpush.bf16.msra.mxu0 0
        %1620 = vmatpush.bf16.msra.mxu0 0
        %1621 = vmatpush.bf16.msra.mxu0 0
        %1622 = vmatpush.bf16.msra.mxu0 0
        %1623 = vmatpush.bf16.msra.mxu0 0
        %1624 = vmatpush.bf16.msra.mxu0 %v1612
        %1625 = vmatmul.bf16.gmra.mxu0 %v1615
        %v1626 = vpop.f32.mrf.mxu0
        %v1627 = vadd.f32 0.0, %v1626
        %v1628 = vpop.f32.mrf.mxu0
        %1629 = vdwg.mxu0
        %v1630 = vrot.slane %v1605, 4
        %v1631 = vsel %vm782, %v1630, %v1561
        %v1632 = vrot.slane %v1561, 4
        %v1633 = vsel %vm782, %v1605, %v1632
        %v1635 = vunpack.c.l.s4 1983009808
        %v1636 = vunpack.c.0.s8 %v1635
        %v1637 = vperm.slane %v1631, %v1636
        %v1639 = vunpack.c.l.s4 1983009808
        %v1640 = vunpack.c.0.s8 %v1639
        %v1641 = vperm.slane %v1633, %v1640
        %v1642 = vrot.slane %v1627, 4
        %v1643 = vsel %vm782, %v1642, %v1583
        %v1644 = vrot.slane %v1583, 4
        %v1645 = vsel %vm782, %v1627, %v1644
        %v1647 = vunpack.c.l.s4 1983009808
        %v1648 = vunpack.c.0.s8 %v1647
        %v1649 = vperm.slane %v1643, %v1648
        %v1651 = vunpack.c.l.s4 1983009808
        %v1652 = vunpack.c.0.s8 %v1651
        %v1653 = vperm.slane %v1645, %v1652
        %v1654 = vrot.slane %v1649, 4
        %v1655 = vsel %vm782, %v1654, %v1637
        %v1656 = vrot.slane %v1637, 4
        %v1657 = vsel %vm782, %v1649, %v1656
        %v1659 = vunpack.c.l.s4 1934713408
        %v1660 = vunpack.c.0.s8 %v1659
        %v1661 = vperm.slane %v1655, %v1660
        %v1663 = vunpack.c.l.s4 1934713408
        %v1664 = vunpack.c.0.s8 %v1663
        %v1665 = vperm.slane %v1657, %v1664
        %v1666 = vrot.slane %v1653, 4
        %v1667 = vsel %vm782, %v1666, %v1641
        %v1668 = vrot.slane %v1641, 4
        %v1669 = vsel %vm782, %v1653, %v1668
        %v1671 = vunpack.c.l.s4 1934713408
        %v1672 = vunpack.c.0.s8 %v1671
        %v1673 = vperm.slane %v1667, %v1672
        %v1675 = vunpack.c.l.s4 1934713408
        %v1676 = vunpack.c.0.s8 %v1675
        %v1677 = vperm.slane %v1669, %v1676
        %v1678 = vrot.slane %v1661, 4
        %v1679 = vsel %vm782, 0.0, %v1678
        %v1680 = vrot.slane %v1665, 4
        %v1681 = vsel %vm782, 0.0, %v1680
        %v1682 = vrot.slane %v1673, 4
        %v1683 = vsel %vm782, 0.0, %v1682
        %v1684 = vrot.slane %v1677, 4
        %v1685 = vsel %vm782, 0.0, %v1684
        %v1686 = vsel %vm782, %v1680, %v1661
        %v1688 = vunpack.c.l.s4 1983009808
        %v1689 = vunpack.c.0.s8 %v1688
        %v1690 = vperm.slane %v1686, %v1689
        %v1691 = vrot.slane %v1681, 4
        %v1692 = vsel %vm782, %v1691, %v1679
        %v1694 = vunpack.c.l.s4 1983009808
        %v1695 = vunpack.c.0.s8 %v1694
        %v1696 = vperm.slane %v1692, %v1695
        %v1697 = vsel %vm782, %v1684, %v1673
        %v1699 = vunpack.c.l.s4 1983009808
        %v1700 = vunpack.c.0.s8 %v1699
        %v1701 = vperm.slane %v1697, %v1700
        %v1702 = vrot.slane %v1685, 4
        %v1703 = vsel %vm782, %v1702, %v1683
        %v1705 = vunpack.c.l.s4 1983009808
        %v1706 = vunpack.c.0.s8 %v1705
        %v1707 = vperm.slane %v1703, %v1706
        %v1708 = vrot.slane %v1696, 4
        %v1709 = vsel %vm782, %v1708, %v1690
        %v1710 = vrot.slane %v1690, 4
        %v1711 = vsel %vm782, %v1696, %v1710
        %v1713 = vunpack.c.l.s4 1934713408
        %v1714 = vunpack.c.0.s8 %v1713
        %v1715 = vperm.slane %v1709, %v1714
        %v1717 = vunpack.c.l.s4 1934713408
        %v1718 = vunpack.c.0.s8 %v1717
        %v1719 = vperm.slane %v1711, %v1718
        %v1720 = vrot.slane %v1707, 4
        %v1721 = vsel %vm782, %v1720, %v1701
        %v1722 = vrot.slane %v1701, 4
        %v1723 = vsel %vm782, %v1707, %v1722
        %v1725 = vunpack.c.l.s4 1934713408
        %v1726 = vunpack.c.0.s8 %v1725
        %v1727 = vperm.slane %v1721, %v1726
        %v1729 = vunpack.c.l.s4 1934713408
        %v1730 = vunpack.c.0.s8 %v1729
        %v1731 = vperm.slane %v1723, %v1730
        %v1732 = vrot.slane %v1727, 4
        %v1733 = vsel %vm782, %v1732, %v1715
        %v1734 = vrot.slane %v1715, 4
        %v1735 = vsel %vm782, %v1727, %v1734
        %v1736 = vrot.slane %v1731, 4
        %v1737 = vsel %vm782, %v1736, %v1719
        %v1738 = vrot.slane %v1719, 4
        %v1739 = vsel %vm782, %v1731, %v1738
        %1741 = vrot.lane.b32.xlu0 %v1735, 32
        %v1742 = vpop.permute.xlu0 %1741
        %1745 = vrot.lane.b32.xlu0 %v1737, 64
        %v1746 = vpop.permute.xlu0 %1745
        %1749 = vrot.lane.b32.xlu0 %v1739, 96
        %v1750 = vpop.permute.xlu0 %1749
        %v1752 = vsel %vm1401, %v1733, %v1742
        %vm1753 = vcmask 523264
        %v1754 = vsel %vm1753, %v1752, %v1746
        %vm1755 = vcmask 785408
        %v1756 = vsel %vm1755, %v1754, %v1750
        %v1757 = vpack.c.bf16 %v1756, %v1756
        %v1758 = vld [vmem:[#allocation11] sm:$0xf]
        %v1759 = vld [vmem:[#allocation11 + $0x4] sm:$0xf]
        %v1760 = vld [vmem:[#allocation11 + $0x8] sm:$0xf]
        %v1761 = vld [vmem:[#allocation11 + $0xc] sm:$0xf]
        %v1762 = vld [vmem:[#allocation11 + $0x10] sm:$0xf]
        %v1763 = vld [vmem:[#allocation11 + $0x14] sm:$0xf]
        %v1764 = vld [vmem:[#allocation11 + $0x18] sm:$0xf]
        %v1765 = vld [vmem:[#allocation11 + $0x1c] sm:$0xf]
        %v1766 = vld [vmem:[#allocation11 + $0x20] sm:$0xf]
        %v1767 = vld [vmem:[#allocation11 + $0x24] sm:$0xf]
        %v1768 = vld [vmem:[#allocation11 + $0x28] sm:$0xf]
        %v1769 = vld [vmem:[#allocation11 + $0x2c] sm:$0xf]
        %v1770 = vld [vmem:[#allocation11 + $0x30] sm:$0xf]
        %v1771 = vld [vmem:[#allocation11 + $0x34] sm:$0xf]
        %v1772 = vld [vmem:[#allocation11 + $0x38] sm:$0xf]
        %v1773 = vld [vmem:[#allocation11 + $0x3c] sm:$0xf]
        %v1774 = vperm.slane %v553, 3
        %v1791 = vunpack.c.l.b16 %v1758
        %v1792 = vunpack.c.l.b16 %v1759
        %v1793 = vunpack.c.l.b16 %v1760
        %v1794 = vunpack.c.l.b16 %v1761
        %v1795 = vunpack.c.l.b16 %v1762
        %v1796 = vunpack.c.l.b16 %v1763
        %v1797 = vunpack.c.l.b16 %v1764
        %v1798 = vunpack.c.l.b16 %v1765
        %v1799 = vunpack.c.l.b16 %v1766
        %v1800 = vunpack.c.l.b16 %v1767
        %v1801 = vunpack.c.l.b16 %v1768
        %v1802 = vunpack.c.l.b16 %v1769
        %v1803 = vunpack.c.l.b16 %v1770
        %v1804 = vunpack.c.l.b16 %v1771
        %v1805 = vunpack.c.l.b16 %v1772
        %v1806 = vunpack.c.l.b16 %v1773
        %v1807 = vpack.c.b16 %v1792, %v1791
        %v1808 = vpack.c.b16 %v1794, %v1793
        %v1809 = vpack.c.b16 %v1796, %v1795
        %v1810 = vpack.c.b16 %v1798, %v1797
        %v1811 = vpack.c.b16 %v1800, %v1799
        %v1812 = vpack.c.b16 %v1802, %v1801
        %v1813 = vpack.c.b16 %v1804, %v1803
        %v1814 = vpack.c.b16 %v1806, %v1805
        %1823 = vmatpush.bf16.msra.mxu0 %v1814
        %1824 = vmatpush.bf16.msra.mxu0 %v1813
        %1825 = vmatpush.bf16.msra.mxu0 %v1812
        %1826 = vmatpush.bf16.msra.mxu0 %v1811
        %1827 = vmatpush.bf16.msra.mxu0 %v1810
        %1828 = vmatpush.bf16.msra.mxu0 %v1809
        %1829 = vmatpush.bf16.msra.mxu0 %v1808
        %1830 = vmatpush.bf16.msra.mxu0 %v1807
        %1831 = vmatmul.bf16.gmra.mxu0 %v1757
        %v1832 = vpop.f32.mrf.mxu0
        %v1833 = vadd.f32 %v1774, %v1832
        %v1834 = vpop.f32.mrf.mxu0
        %1835 = vdwg.mxu0
        %v1836 = vadd.f32 %v552, %v1833
        %1837 = vadd.xlane.f32.xlu0 %v1836
        %v1838 = vpop.xlane.xlu0 %1837
        %v1839 = vrcp.pop 128.0
        %v1840 = vmul.f32 128.0, %v1839
        %v1841 = vsub.f32 1.0, %v1840
        %v1842 = vmul.f32 %v1839, %v1841
        %v1843 = vadd.f32 %v1839, %v1842
        %vm1844 = vweird.f32 %v1839
        %v1845 = vsel %vm1844, %v1839, %v1843
        %v1846 = vmul.f32 %v1838, %v1845
        %v1847 = vsub.f32 %v1836, %v1846
        %v1848 = vmul.f32 %v1847, %v1847
        %1849 = vadd.xlane.f32.xlu0 %v1848
        %v1850 = vpop.xlane.xlu0 %1849
        %v1851 = vmul.f32 %v1850, %v1845
        %v1852 = vadd.f32 %v1851, 1e-05
        %v1853 = vrsqrt.pop %v1852
        %v1854 = vmul.f32 %v1853, %v1852
        %v1855 = vmul.f32 %v1854, %v1853
        %v1856 = vmul.f32 0.5, %v1855
        %v1857 = vsub.f32 1.5, %v1856
        %v1858 = vmul.f32 %v1853, %v1857
        %vm1859 = vweird.f32 %v1852
        %vm1860 = vweird.f32 %v1853
        %vm1861 = vmor %vm1859, %vm1860
        %v1862 = vsel %vm1861, %v1853, %v1858
        %v1863 = vmul.f32 %v1847, %v1862
        %v1864 = vperm.slane %v553, 4
        %v1865 = vmul.f32 %v1863, %v1864
        %v1866 = vperm.slane %v553, 5
        %v1867 = vadd.f32 %v1865, %v1866
        %v1868 = vpack.c.bf16 %v1867, %v1867
        %v1869 = vld [vmem:[#allocation13] sm:$0xff]
        %v1870 = vld [vmem:[#allocation13 + $0x8] sm:$0xf]
        %v1871 = vld [vmem:[#allocation13 + $0xc] sm:$0xff]
        %v1872 = vld [vmem:[#allocation13 + $0x14] sm:$0xf]
        %v1873 = vld [vmem:[#allocation13 + $0x18] sm:$0xff]
        %v1874 = vld [vmem:[#allocation13 + $0x20] sm:$0xf]
        %v1875 = vld [vmem:[#allocation13 + $0x24] sm:$0xff]
        %v1876 = vld [vmem:[#allocation13 + $0x2c] sm:$0xf]
        %v1877 = vld [vmem:[#allocation13 + $0x30] sm:$0xff]
        %v1878 = vld [vmem:[#allocation13 + $0x38] sm:$0xf]
        %v1879 = vld [vmem:[#allocation13 + $0x3c] sm:$0xff]
        %v1880 = vld [vmem:[#allocation13 + $0x44] sm:$0xf]
        %v1881 = vld [vmem:[#allocation13 + $0x48] sm:$0xff]
        %v1882 = vld [vmem:[#allocation13 + $0x50] sm:$0xf]
        %v1883 = vld [vmem:[#allocation13 + $0x54] sm:$0xff]
        %v1884 = vld [vmem:[#allocation13 + $0x5c] sm:$0xf]
        %v1885 = vld [vmem:[#allocation13 + $0x60] sm:$0xff]
        %v1886 = vld [vmem:[#allocation13 + $0x68] sm:$0xf]
        %v1887 = vld [vmem:[#allocation13 + $0x6c] sm:$0xff]
        %v1888 = vld [vmem:[#allocation13 + $0x74] sm:$0xf]
        %v1889 = vld [vmem:[#allocation13 + $0x78] sm:$0xff]
        %v1890 = vld [vmem:[#allocation13 + $0x80] sm:$0xf]
        %v1891 = vld [vmem:[#allocation13 + $0x84] sm:$0xff]
        %v1892 = vld [vmem:[#allocation13 + $0x8c] sm:$0xf]
        %v1893 = vld [vmem:[#allocation13 + $0x90] sm:$0xff]
        %v1894 = vld [vmem:[#allocation13 + $0x98] sm:$0xf]
        %v1895 = vld [vmem:[#allocation13 + $0x9c] sm:$0xff]
        %v1896 = vld [vmem:[#allocation13 + $0xa4] sm:$0xf]
        %v1897 = vld [vmem:[#allocation13 + $0xa8] sm:$0xff]
        %v1898 = vld [vmem:[#allocation13 + $0xb0] sm:$0xf]
        %v1899 = vld [vmem:[#allocation13 + $0xb4] sm:$0xff]
        %v1900 = vld [vmem:[#allocation13 + $0xbc] sm:$0xf]
        %v1901 = vld [vmem:[%s9] sm:$0x7]
        %v1903 = vperm.slane %v1901, 0
        %v1904 = vperm.slane %v1901, 1
        %v1905 = vperm.slane %v1901, 2
        %v1941 = vunpack.c.l.b16 %v1869
        %v1942 = vunpack.c.h.b16 %v1869
        %v1943 = vunpack.c.l.b16 %v1870
        %v1944 = vunpack.c.l.b16 %v1871
        %v1945 = vunpack.c.h.b16 %v1871
        %v1946 = vunpack.c.l.b16 %v1872
        %v1947 = vunpack.c.l.b16 %v1873
        %v1948 = vunpack.c.h.b16 %v1873
        %v1949 = vunpack.c.l.b16 %v1874
        %v1950 = vunpack.c.l.b16 %v1875
        %v1951 = vunpack.c.h.b16 %v1875
        %v1952 = vunpack.c.l.b16 %v1876
        %v1953 = vunpack.c.l.b16 %v1877
        %v1954 = vunpack.c.h.b16 %v1877
        %v1955 = vunpack.c.l.b16 %v1878
        %v1956 = vunpack.c.l.b16 %v1879
        %v1957 = vunpack.c.h.b16 %v1879
        %v1958 = vunpack.c.l.b16 %v1880
        %v1959 = vunpack.c.l.b16 %v1881
        %v1960 = vunpack.c.h.b16 %v1881
        %v1961 = vunpack.c.l.b16 %v1882
        %v1962 = vunpack.c.l.b16 %v1883
        %v1963 = vunpack.c.h.b16 %v1883
        %v1964 = vunpack.c.l.b16 %v1884
        %v1965 = vunpack.c.l.b16 %v1885
        %v1966 = vunpack.c.h.b16 %v1885
        %v1967 = vunpack.c.l.b16 %v1886
        %v1968 = vunpack.c.l.b16 %v1887
        %v1969 = vunpack.c.h.b16 %v1887
        %v1970 = vunpack.c.l.b16 %v1888
        %v1971 = vunpack.c.l.b16 %v1889
        %v1972 = vunpack.c.h.b16 %v1889
        %v1973 = vunpack.c.l.b16 %v1890
        %v1974 = vunpack.c.l.b16 %v1891
        %v1975 = vunpack.c.h.b16 %v1891
        %v1976 = vunpack.c.l.b16 %v1892
        %v1977 = vunpack.c.l.b16 %v1893
        %v1978 = vunpack.c.h.b16 %v1893
        %v1979 = vunpack.c.l.b16 %v1894
        %v1980 = vunpack.c.l.b16 %v1895
        %v1981 = vunpack.c.h.b16 %v1895
        %v1982 = vunpack.c.l.b16 %v1896
        %v1983 = vunpack.c.l.b16 %v1897
        %v1984 = vunpack.c.h.b16 %v1897
        %v1985 = vunpack.c.l.b16 %v1898
        %v1986 = vunpack.c.l.b16 %v1899
        %v1987 = vunpack.c.h.b16 %v1899
        %v1988 = vunpack.c.l.b16 %v1900
        %v1989 = vpack.c.b16 %v1944, %v1941
        %v1990 = vpack.c.b16 %v1945, %v1942
        %v1991 = vpack.c.b16 %v1946, %v1943
        %v1992 = vpack.c.b16 %v1950, %v1947
        %v1993 = vpack.c.b16 %v1951, %v1948
        %v1994 = vpack.c.b16 %v1952, %v1949
        %v1995 = vpack.c.b16 %v1956, %v1953
        %v1996 = vpack.c.b16 %v1957, %v1954
        %v1997 = vpack.c.b16 %v1958, %v1955
        %v1998 = vpack.c.b16 %v1962, %v1959
        %v1999 = vpack.c.b16 %v1963, %v1960
        %v2000 = vpack.c.b16 %v1964, %v1961
        %v2001 = vpack.c.b16 %v1968, %v1965
        %v2002 = vpack.c.b16 %v1969, %v1966
        %v2003 = vpack.c.b16 %v1970, %v1967
        %v2004 = vpack.c.b16 %v1974, %v1971
        %v2005 = vpack.c.b16 %v1975, %v1972
        %v2006 = vpack.c.b16 %v1976, %v1973
        %v2007 = vpack.c.b16 %v1980, %v1977
        %v2008 = vpack.c.b16 %v1981, %v1978
        %v2009 = vpack.c.b16 %v1982, %v1979
        %v2010 = vpack.c.b16 %v1986, %v1983
        %v2011 = vpack.c.b16 %v1987, %v1984
        %v2012 = vpack.c.b16 %v1988, %v1985
        %2037 = vmatpush.bf16.msra.mxu0 %v2010
        %2038 = vmatpush.bf16.msra.mxu0 %v2007
        %2039 = vmatpush.bf16.msra.mxu0 %v2004
        %2040 = vmatpush.bf16.msra.mxu0 %v2001
        %2041 = vmatpush.bf16.msra.mxu0 %v1998
        %2042 = vmatpush.bf16.msra.mxu0 %v1995
        %2043 = vmatpush.bf16.msra.mxu0 %v1992
        %2044 = vmatpush.bf16.msra.mxu0 %v1989
        %2045 = vmatmul.bf16.gmra.mxu0 %v1868
        %v2046 = vpop.f32.mrf.mxu0
        %v2047 = vadd.f32 %v1903, %v2046
        %v2048 = vpop.f32.mrf.mxu0
        %2049 = vdwg.mxu0
        %2050 = vmatpush.bf16.msra.mxu0 %v2011
        %2051 = vmatpush.bf16.msra.mxu0 %v2008
        %2052 = vmatpush.bf16.msra.mxu0 %v2005
        %2053 = vmatpush.bf16.msra.mxu0 %v2002
        %2054 = vmatpush.bf16.msra.mxu0 %v1999
        %2055 = vmatpush.bf16.msra.mxu0 %v1996
        %2056 = vmatpush.bf16.msra.mxu0 %v1993
        %2057 = vmatpush.bf16.msra.mxu0 %v1990
        %2058 = vmatmul.bf16.gmra.mxu0 %v1868
        %v2059 = vpop.f32.mrf.mxu0
        %v2060 = vadd.f32 %v1904, %v2059
        %v2061 = vpop.f32.mrf.mxu0
        %2062 = vdwg.mxu0
        %2063 = vmatpush.bf16.msra.mxu0 %v2012
        %2064 = vmatpush.bf16.msra.mxu0 %v2009
        %2065 = vmatpush.bf16.msra.mxu0 %v2006
        %2066 = vmatpush.bf16.msra.mxu0 %v2003
        %2067 = vmatpush.bf16.msra.mxu0 %v2000
        %2068 = vmatpush.bf16.msra.mxu0 %v1997
        %2069 = vmatpush.bf16.msra.mxu0 %v1994
        %2070 = vmatpush.bf16.msra.mxu0 %v1991
        %2071 = vmatmul.bf16.gmra.mxu0 %v1868
        %v2072 = vpop.f32.mrf.mxu0
        %v2073 = vadd.f32 %v1905, %v2072
        %v2074 = vpop.f32.mrf.mxu0
        %2075 = vdwg.mxu0
        %v2076 = vmax.f32 %v2047, 0.0
        %v2077 = vmax.f32 %v2060, 0.0
        %v2078 = vmax.f32 %v2073, 0.0
        %v2079 = vpack.c.bf16 %v2076, %v2076
        %v2080 = vpack.c.bf16 %v2077, %v2077
        %v2081 = vpack.c.bf16 %v2078, %v2078
        %v2082 = vld [vmem:[#allocation14] sm:$0xf]
        %v2083 = vld [vmem:[#allocation14 + $0x4] sm:$0xf]
        %v2084 = vld [vmem:[#allocation14 + $0x8] sm:$0xf]
        %v2085 = vld [vmem:[#allocation14 + $0xc] sm:$0xf]
        %v2086 = vld [vmem:[#allocation14 + $0x10] sm:$0xf]
        %v2087 = vld [vmem:[#allocation14 + $0x14] sm:$0xf]
        %v2088 = vld [vmem:[#allocation14 + $0x18] sm:$0xf]
        %v2089 = vld [vmem:[#allocation14 + $0x1c] sm:$0xf]
        %v2090 = vld [vmem:[#allocation14 + $0x20] sm:$0xf]
        %v2091 = vld [vmem:[#allocation14 + $0x24] sm:$0xf]
        %v2092 = vld [vmem:[#allocation14 + $0x28] sm:$0xf]
        %v2093 = vld [vmem:[#allocation14 + $0x2c] sm:$0xf]
        %v2094 = vld [vmem:[#allocation14 + $0x30] sm:$0xf]
        %v2095 = vld [vmem:[#allocation14 + $0x34] sm:$0xf]
        %v2096 = vld [vmem:[#allocation14 + $0x38] sm:$0xf]
        %v2097 = vld [vmem:[#allocation14 + $0x3c] sm:$0xf]
        %v2098 = vld [vmem:[#allocation14 + $0x40] sm:$0xf]
        %v2099 = vld [vmem:[#allocation14 + $0x44] sm:$0xf]
        %v2100 = vld [vmem:[#allocation14 + $0x48] sm:$0xf]
        %v2101 = vld [vmem:[#allocation14 + $0x4c] sm:$0xf]
        %v2102 = vld [vmem:[#allocation14 + $0x50] sm:$0xf]
        %v2103 = vld [vmem:[#allocation14 + $0x54] sm:$0xf]
        %v2104 = vld [vmem:[#allocation14 + $0x58] sm:$0xf]
        %v2105 = vld [vmem:[#allocation14 + $0x5c] sm:$0xf]
        %v2106 = vld [vmem:[#allocation14 + $0x60] sm:$0xf]
        %v2107 = vld [vmem:[#allocation14 + $0x64] sm:$0xf]
        %v2108 = vld [vmem:[#allocation14 + $0x68] sm:$0xf]
        %v2109 = vld [vmem:[#allocation14 + $0x6c] sm:$0xf]
        %v2110 = vld [vmem:[#allocation14 + $0x70] sm:$0xf]
        %v2111 = vld [vmem:[#allocation14 + $0x74] sm:$0xf]
        %v2112 = vld [vmem:[#allocation14 + $0x78] sm:$0xf]
        %v2113 = vld [vmem:[#allocation14 + $0x7c] sm:$0xf]
        %v2114 = vld [vmem:[#allocation14 + $0x80] sm:$0xf]
        %v2115 = vld [vmem:[#allocation14 + $0x84] sm:$0xf]
        %v2116 = vld [vmem:[#allocation14 + $0x88] sm:$0xf]
        %v2117 = vld [vmem:[#allocation14 + $0x8c] sm:$0xf]
        %v2118 = vld [vmem:[#allocation14 + $0x90] sm:$0xf]
        %v2119 = vld [vmem:[#allocation14 + $0x94] sm:$0xf]
        %v2120 = vld [vmem:[#allocation14 + $0x98] sm:$0xf]
        %v2121 = vld [vmem:[#allocation14 + $0x9c] sm:$0xf]
        %v2122 = vld [vmem:[#allocation14 + $0xa0] sm:$0xf]
        %v2123 = vld [vmem:[#allocation14 + $0xa4] sm:$0xf]
        %v2124 = vld [vmem:[#allocation14 + $0xa8] sm:$0xf]
        %v2125 = vld [vmem:[#allocation14 + $0xac] sm:$0xf]
        %v2126 = vld [vmem:[#allocation14 + $0xb0] sm:$0xf]
        %v2127 = vld [vmem:[#allocation14 + $0xb4] sm:$0xf]
        %v2128 = vld [vmem:[#allocation14 + $0xb8] sm:$0xf]
        %v2129 = vld [vmem:[#allocation14 + $0xbc] sm:$0xf]
        %v2130 = vperm.slane %v553, 6
        %v2179 = vunpack.c.l.b16 %v2082
        %v2180 = vunpack.c.l.b16 %v2083
        %v2181 = vunpack.c.l.b16 %v2084
        %v2182 = vunpack.c.l.b16 %v2085
        %v2183 = vunpack.c.l.b16 %v2086
        %v2184 = vunpack.c.l.b16 %v2087
        %v2185 = vunpack.c.l.b16 %v2088
        %v2186 = vunpack.c.l.b16 %v2089
        %v2187 = vunpack.c.l.b16 %v2090
        %v2188 = vunpack.c.l.b16 %v2091
        %v2189 = vunpack.c.l.b16 %v2092
        %v2190 = vunpack.c.l.b16 %v2093
        %v2191 = vunpack.c.l.b16 %v2094
        %v2192 = vunpack.c.l.b16 %v2095
        %v2193 = vunpack.c.l.b16 %v2096
        %v2194 = vunpack.c.l.b16 %v2097
        %v2195 = vunpack.c.l.b16 %v2098
        %v2196 = vunpack.c.l.b16 %v2099
        %v2197 = vunpack.c.l.b16 %v2100
        %v2198 = vunpack.c.l.b16 %v2101
        %v2199 = vunpack.c.l.b16 %v2102
        %v2200 = vunpack.c.l.b16 %v2103
        %v2201 = vunpack.c.l.b16 %v2104
        %v2202 = vunpack.c.l.b16 %v2105
        %v2203 = vunpack.c.l.b16 %v2106
        %v2204 = vunpack.c.l.b16 %v2107
        %v2205 = vunpack.c.l.b16 %v2108
        %v2206 = vunpack.c.l.b16 %v2109
        %v2207 = vunpack.c.l.b16 %v2110
        %v2208 = vunpack.c.l.b16 %v2111
        %v2209 = vunpack.c.l.b16 %v2112
        %v2210 = vunpack.c.l.b16 %v2113
        %v2211 = vunpack.c.l.b16 %v2114
        %v2212 = vunpack.c.l.b16 %v2115
        %v2213 = vunpack.c.l.b16 %v2116
        %v2214 = vunpack.c.l.b16 %v2117
        %v2215 = vunpack.c.l.b16 %v2118
        %v2216 = vunpack.c.l.b16 %v2119
        %v2217 = vunpack.c.l.b16 %v2120
        %v2218 = vunpack.c.l.b16 %v2121
        %v2219 = vunpack.c.l.b16 %v2122
        %v2220 = vunpack.c.l.b16 %v2123
        %v2221 = vunpack.c.l.b16 %v2124
        %v2222 = vunpack.c.l.b16 %v2125
        %v2223 = vunpack.c.l.b16 %v2126
        %v2224 = vunpack.c.l.b16 %v2127
        %v2225 = vunpack.c.l.b16 %v2128
        %v2226 = vunpack.c.l.b16 %v2129
        %v2227 = vpack.c.b16 %v2180, %v2179
        %v2228 = vpack.c.b16 %v2182, %v2181
        %v2229 = vpack.c.b16 %v2184, %v2183
        %v2230 = vpack.c.b16 %v2186, %v2185
        %v2231 = vpack.c.b16 %v2188, %v2187
        %v2232 = vpack.c.b16 %v2190, %v2189
        %v2233 = vpack.c.b16 %v2192, %v2191
        %v2234 = vpack.c.b16 %v2194, %v2193
        %v2235 = vpack.c.b16 %v2196, %v2195
        %v2236 = vpack.c.b16 %v2198, %v2197
        %v2237 = vpack.c.b16 %v2200, %v2199
        %v2238 = vpack.c.b16 %v2202, %v2201
        %v2239 = vpack.c.b16 %v2204, %v2203
        %v2240 = vpack.c.b16 %v2206, %v2205
        %v2241 = vpack.c.b16 %v2208, %v2207
        %v2242 = vpack.c.b16 %v2210, %v2209
        %v2243 = vpack.c.b16 %v2212, %v2211
        %v2244 = vpack.c.b16 %v2214, %v2213
        %v2245 = vpack.c.b16 %v2216, %v2215
        %v2246 = vpack.c.b16 %v2218, %v2217
        %v2247 = vpack.c.b16 %v2220, %v2219
        %v2248 = vpack.c.b16 %v2222, %v2221
        %v2249 = vpack.c.b16 %v2224, %v2223
        %v2250 = vpack.c.b16 %v2226, %v2225
        %2275 = vmatpush.bf16.msra.mxu0 %v2234
        %2276 = vmatpush.bf16.msra.mxu0 %v2233
        %2277 = vmatpush.bf16.msra.mxu0 %v2232
        %2278 = vmatpush.bf16.msra.mxu0 %v2231
        %2279 = vmatpush.bf16.msra.mxu0 %v2230
        %2280 = vmatpush.bf16.msra.mxu0 %v2229
        %2281 = vmatpush.bf16.msra.mxu0 %v2228
        %2282 = vmatpush.bf16.msra.mxu0 %v2227
        %2283 = vmatmul.bf16.gmra.mxu0 %v2079
        %v2284 = vpop.f32.mrf.mxu0
        %v2285 = vadd.f32 %v2130, %v2284
        %v2286 = vpop.f32.mrf.mxu0
        %2287 = vdwg.mxu0
        %2288 = vmatpush.bf16.msra.mxu0 %v2242
        %2289 = vmatpush.bf16.msra.mxu0 %v2241
        %2290 = vmatpush.bf16.msra.mxu0 %v2240
        %2291 = vmatpush.bf16.msra.mxu0 %v2239
        %2292 = vmatpush.bf16.msra.mxu0 %v2238
        %2293 = vmatpush.bf16.msra.mxu0 %v2237
        %2294 = vmatpush.bf16.msra.mxu0 %v2236
        %2295 = vmatpush.bf16.msra.mxu0 %v2235
        %2296 = vmatmul.bf16.gmra.mxu0 %v2080
        %v2297 = vpop.f32.mrf.mxu0
        %v2298 = vadd.f32 %v2285, %v2297
        %v2299 = vpop.f32.mrf.mxu0
        %2300 = vdwg.mxu0
        %2301 = vmatpush.bf16.msra.mxu0 %v2250
        %2302 = vmatpush.bf16.msra.mxu0 %v2249
        %2303 = vmatpush.bf16.msra.mxu0 %v2248
        %2304 = vmatpush.bf16.msra.mxu0 %v2247
        %2305 = vmatpush.bf16.msra.mxu0 %v2246
        %2306 = vmatpush.bf16.msra.mxu0 %v2245
        %2307 = vmatpush.bf16.msra.mxu0 %v2244
        %2308 = vmatpush.bf16.msra.mxu0 %v2243
        %2309 = vmatmul.bf16.gmra.mxu0 %v2081
        %v2310 = vpop.f32.mrf.mxu0
        %v2311 = vadd.f32 %v2298, %v2310
        %v2312 = vpop.f32.mrf.mxu0
        %2313 = vdwg.mxu0
        %v2314 = vadd.f32 %v1867, %v2311
        %2315 = vadd.xlane.f32.xlu0 %v2314
        %v2316 = vpop.xlane.xlu0 %2315
        %v2317 = vmul.f32 %v2316, %v1845
        %v2318 = vsub.f32 %v2314, %v2317
        %v2319 = vmul.f32 %v2318, %v2318
        %2320 = vadd.xlane.f32.xlu0 %v2319
        %v2321 = vpop.xlane.xlu0 %2320
        %v2322 = vmul.f32 %v2321, %v1845
        %v2323 = vadd.f32 %v2322, 1e-05
        %v2324 = vrsqrt.pop %v2323
        %v2325 = vmul.f32 %v2324, %v2323
        %v2326 = vmul.f32 %v2325, %v2324
        %v2327 = vmul.f32 0.5, %v2326
        %v2328 = vsub.f32 1.5, %v2327
        %v2329 = vmul.f32 %v2324, %v2328
        %vm2330 = vweird.f32 %v2323
        %vm2331 = vweird.f32 %v2324
        %vm2332 = vmor %vm2330, %vm2331
        %v2333 = vsel %vm2332, %v2324, %v2329
        %v2334 = vmul.f32 %v2318, %v2333
        %v2335 = vperm.slane %v553, 7
        %v2336 = vmul.f32 %v2334, %v2335
        %v2337 = vperm.slane %v554, 0
        %v2338 = vadd.f32 %v2336, %v2337
        %2339 = vst [vmem:[%s549] sm:$0xff] %v2338
        %s2340 = sand.u32 %s266, 1
        %s2341 = scalar_lea.sflag [#allocation4], %s2340
        %s2342 = sand.u32 %s266, 1
        %s2343 = smul.addr %s2342, 8
        %s2344 = scalar_lea.vmem [#allocation17], %s2343
        // Predicated region
        $region97: #{tpu_custom_call.1} parent=59 // pred_check
          %p2345 = pneg %p276
        $region98: #{tpu_custom_call.1} parent=59 // pred_check_branch
          %2347 = sbr.rel (%p2345) target = $region100
        $region99: #{tpu_custom_call.1} parent=59 // pred_region
          %2349 = vsyncadd %s2341, 0
          %s2350 = smul.addr %s33, 8
          %s2351 = scalar_lea.hbm %s10, %s2350
          %s2353 = sshll.u32 %s2344, 4
          %s2354 = int_to_ptr.vmem [resolvable:$true] %s2353
          %s2355 = sshll.u32 %s2351, 4
          %s2356 = int_to_ptr.hbm [resolvable:$true] %s2355
          %2358 = dma.vmem_to_hbm [thread:$0]  %s2354, 128, %s2356, %s2341
        $region100: #{tpu_custom_call.1} parent=59 // pred_fallthru
          _
      $region60: #{tpu_custom_call.1} parent=5 // pred_fallthru
        _
      %p2359 = scmp.le.s32.totalorder 2, %s28
      // Predicated region
      $region101: #{tpu_custom_call.1} parent=5 // pred_check
        %p2360 = pneg %p2359
      $region102: #{tpu_custom_call.1} parent=5 // pred_check_branch
        %2362 = sbr.rel (%p2360) target = $region104
      $region103: #{tpu_custom_call.1} parent=5 // pred_region
        %s2363 = ssub.s32 %s28, 2
        // Predicated region
        $region105: #{tpu_custom_call.1} parent=103 // pred_check
          %p2364 = pneg %p282
        $region106: #{tpu_custom_call.1} parent=103 // pred_check_branch
          %2366 = sbr.rel (%p2364) target = $region108
        $region107: #{tpu_custom_call.1} parent=103 // pred_region
          %s2367 = sand.u32 %s267, 1
          %s2368 = scalar_lea.sflag [#allocation4], %s2367
          %s2369 = sand.u32 %s267, 1
          %s2370 = smul.addr %s2369, 8
          %s2371 = scalar_lea.vmem [#allocation17], %s2370
          %2373 = dma.done %s2368, 128
        $region108: #{tpu_custom_call.1} parent=103 // pred_fallthru
          _
      $region104: #{tpu_custom_call.1} parent=5 // pred_fallthru
        _
    $region6: #{tpu_custom_call.1} parent=1 // loop_footer
      %s32 = sadd.s32 1, %s28
    $region7: #{tpu_custom_call.1} parent=1 // loop_footer_branch
      %27 = sbr.rel target = $region3
    $region8: #{tpu_custom_call.1} parent=1 // loop_exit
      _
    %2374 = vsyncpa [#allocation3], 1
    %s2375 = scalar_lea.sflag [#allocation3], 1
    %2376 = vsyncpa %s2375, 1
    %2377 = vsyncpa [#allocation6], 1
    %s2378 = scalar_lea.sflag [#allocation6], 1
    %2379 = vsyncpa %s2378, 1
    %2380 = vsyncpa [#allocation9], 1
    %2381 = vsyncpa [#allocation12], 1
    %2382 = vsyncpa [#allocation15], 1
    %2383 = vsyncpa [#allocation4], 1
    %s2384 = scalar_lea.sflag [#allocation4], 1
    %2385 = vsyncpa %s2384, 1

</llo_original>
